<compile_context>
chip_gen: v5e
topology: v5e:2x2
jax: 0.10.0
libtpu: 0.0.40
codegen_flags: <defaults>
</compile_context>

<pallas_src>
import functools

import jax
import jax.numpy as jnp
import numpy as np
from jax.experimental import pallas as pl
from jax.experimental.pallas import tpu as pltpu

_BF16 = jnp.bfloat16
_F32 = jnp.float32


# ----------------------------------------------------------------------------
# Kernel
# ----------------------------------------------------------------------------

def _layer_norm(x, w, b, eps=1e-5):
    mu = jnp.mean(x, axis=-1, keepdims=True)
    var = jnp.mean((x - mu) ** 2, axis=-1, keepdims=True)
    return (x - mu) * jax.lax.rsqrt(var + eps) * w + b


def fused_encoder_kernel(xp_ref, wp_ref, bp_ref, pos_ref, bias_ref,
                         wqkv_ref, bqkv_ref, wo_ref, bo_ref,
                         ln1w_ref, ln1b_ref, ln2w_ref, ln2b_ref,
                         w1_ref, b1_ref, w2_ref, b2_ref,
                         nw_ref, nb_ref, o_ref,
                         *, batch, tokens, num_heads, num_layers):
    E = wp_ref.shape[1]
    Dh = E // num_heads
    BT = batch * tokens
    scale = 1.0 / float(np.sqrt(Dh))

    # ---- patch embedding (Conv1d as matmul) + positional encoding ----
    x = jnp.dot(xp_ref[...].astype(_BF16), wp_ref[...],
                preferred_element_type=_F32) + bp_ref[...]          # (BT, E)
    pos_bt = jnp.concatenate([pos_ref[...]] * batch, axis=0)        # (BT, E)
    x = x + pos_bt

    attn_bias = bias_ref[...]                                       # (BT, BT)

    # ---- transformer layers (unrolled; weights stacked over layers) ----
    for l in range(num_layers):
        wqkv = wqkv_ref[l]                                          # (E, 3E) bf16
        w1 = w1_ref[l]                                              # (E, M)  bf16
        w2 = w2_ref[l]                                              # (M, E)  bf16

        # --- multi-head self-attention (packed QKV projection) ---
        qkv = jnp.dot(x.astype(_BF16), wqkv,
                      preferred_element_type=_F32) + bqkv_ref[l]    # (BT, 3E)
        attn = jnp.zeros((BT, E), _F32)
        for h in range(num_heads):
            qh = (qkv[:, h * Dh:(h + 1) * Dh] * scale).astype(_BF16)
            kh = qkv[:, E + h * Dh:E + (h + 1) * Dh].astype(_BF16)
            vh = qkv[:, 2 * E + h * Dh:2 * E + (h + 1) * Dh].astype(_BF16)
            # scores over the whole (B*T) slab; the block-diagonal bias kills
            # cross-batch attention exactly (exp underflows to 0).
            s = jax.lax.dot_general(qh, kh, (((1,), (1,)), ((), ())),
                                    preferred_element_type=_F32) + attn_bias
            s = s - jnp.max(s, axis=-1, keepdims=True)
            p = jnp.exp(s)
            p = p * pl.reciprocal(jnp.sum(p, axis=-1, keepdims=True),
                                  approx=True)
            hout = jnp.dot(p.astype(_BF16), vh,
                           preferred_element_type=_F32)             # (BT, Dh)
            # fold head output straight into the output projection (no concat)
            attn = attn + jnp.dot(hout.astype(_BF16), wo_ref[l, h],
                                  preferred_element_type=_F32)
        attn = attn + bo_ref[l]

        # --- residual + norm1 (post-norm) ---
        x = _layer_norm(x + attn, ln1w_ref[l], ln1b_ref[l])

        # --- feed forward: Linear -> ReLU -> Linear ---
        h1 = jnp.maximum(
            jnp.dot(x.astype(_BF16), w1, preferred_element_type=_F32)
            + b1_ref[l], 0.0)
        ff = jnp.dot(h1.astype(_BF16), w2,
                     preferred_element_type=_F32) + b2_ref[l]

        # --- residual + norm2 ---
        x = _layer_norm(x + ff, ln2w_ref[l], ln2b_ref[l])

    # ---- final LayerNorm + mean over tokens per batch element ----
    xn = _layer_norm(x, nw_ref[...], nb_ref[...])
    pooled = [jnp.mean(xn[b * tokens:(b + 1) * tokens, :], axis=0,
                       keepdims=True) for b in range(batch)]
    o_ref[...] = jnp.concatenate(pooled, axis=0)                    # (B, E)


# ----------------------------------------------------------------------------
# Wrapper
# ----------------------------------------------------------------------------

def _full_spec(shape):
    zeros = (0,) * len(shape)
    return pl.BlockSpec(shape, lambda i, _z=zeros: _z)


def eeg_transformer_encoder(x, params, *, patch_size, num_heads):
    """Forward pass. x: (B, C, L) float32 (PyTorch Conv1d NCL layout)."""
    B, C, L = x.shape
    E = params["proj_w"].shape[0]
    T = L // patch_size
    CP = C * patch_size
    BT = B * T
    Dh = E // num_heads
    layers = params["layers"]
    n_layers = len(layers)
    M = layers[0]["w1"].shape[0]

    # -------- non-overlapping patches: (B*T, C*P), (c, p) minor order --------
    xp = x[:, :, :T * patch_size].reshape(B, C, T, patch_size)
    xp = jnp.transpose(xp, (0, 2, 1, 3)).reshape(BT, CP)

    # -------- weights: pre-transposed, stacked over layers, bf16 for MXU ----
    w_proj = params["proj_w"].reshape(E, CP).T.astype(_BF16)          # (CP, E)
    b_proj = params["proj_b"].reshape(1, E)
    pos = params["pos_embed"][0, :T]                                  # (T, E)

    wqkv = jnp.stack([lp["wqkv"].T for lp in layers]).astype(_BF16)   # (L, E, 3E)
    bqkv = jnp.stack([lp["bqkv"].reshape(1, 3 * E) for lp in layers])
    wo = jnp.stack([lp["wo"].T.reshape(num_heads, Dh, E)
                    for lp in layers]).astype(_BF16)                  # (L, H, Dh, E)
    bo = jnp.stack([lp["bo"].reshape(1, E) for lp in layers])
    ln1w = jnp.stack([lp["ln1_w"].reshape(1, E) for lp in layers])
    ln1b = jnp.stack([lp["ln1_b"].reshape(1, E) for lp in layers])
    ln2w = jnp.stack([lp["ln2_w"].reshape(1, E) for lp in layers])
    ln2b = jnp.stack([lp["ln2_b"].reshape(1, E) for lp in layers])
    w1 = jnp.stack([lp["w1"].T for lp in layers]).astype(_BF16)       # (L, E, M)
    b1 = jnp.stack([lp["b1"].reshape(1, M) for lp in layers])
    w2 = jnp.stack([lp["w2"].T for lp in layers]).astype(_BF16)       # (L, M, E)
    b2 = jnp.stack([lp["b2"].reshape(1, E) for lp in layers])
    norm_w = params["norm_w"].reshape(1, E)
    norm_b = params["norm_b"].reshape(1, E)

    # block-diagonal additive mask: tokens only attend within their own batch
    tok_batch = jnp.arange(BT, dtype=jnp.int32) // T
    attn_bias = jnp.where(tok_batch[:, None] == tok_batch[None, :],
                          0.0, -1e30).astype(_F32)

    kernel = functools.partial(fused_encoder_kernel, batch=B, tokens=T,
                               num_heads=num_heads, num_layers=n_layers)

    in_specs = [
        _full_spec((BT, CP)),                      # xp
        _full_spec((CP, E)),                       # w_proj (bf16)
        _full_spec((1, E)),                        # b_proj
        _full_spec((T, E)),                        # pos
        _full_spec((BT, BT)),                      # attention bias
        _full_spec((n_layers, E, 3 * E)),          # wqkv (bf16)
        _full_spec((n_layers, 1, 3 * E)),          # bqkv
        _full_spec((n_layers, num_heads, Dh, E)),  # wo per head (bf16)
        _full_spec((n_layers, 1, E)),              # bo
        _full_spec((n_layers, 1, E)),              # ln1 w
        _full_spec((n_layers, 1, E)),              # ln1 b
        _full_spec((n_layers, 1, E)),              # ln2 w
        _full_spec((n_layers, 1, E)),              # ln2 b
        _full_spec((n_layers, E, M)),              # w1 (bf16)
        _full_spec((n_layers, 1, M)),              # b1
        _full_spec((n_layers, M, E)),              # w2 (bf16)
        _full_spec((n_layers, 1, E)),              # b2
        _full_spec((1, E)),                        # final norm w
        _full_spec((1, E)),                        # final norm b
    ]

    # TODO(synk): at realistic EEG sizes (large B*T / E) tile the grid instead
    # of the single full-array VMEM block used here (toy shapes fit trivially).
    return pl.pallas_call(
        kernel,
        out_shape=jax.ShapeDtypeStruct((B, E), _F32),
        grid=(1,),
        in_specs=in_specs,
        out_specs=pl.BlockSpec((B, E), lambda i: (0, 0)),
        compiler_params=pltpu.CompilerParams(
            dimension_semantics=("arbitrary",)),
    )(xp, w_proj, b_proj, pos, attn_bias,
      wqkv, bqkv, wo, bo, ln1w, ln1b, ln2w, ln2b,
      w1, b1, w2, b2, norm_w, norm_b)


# ----------------------------------------------------------------------------
# Pure-JAX reference (identical bf16-at-matmul numerics) for validation
# ----------------------------------------------------------------------------

def reference_forward(x, params, *, patch_size, num_heads):
    B, C, L = x.shape
    E = params["proj_w"].shape[0]
    T = L // patch_size
    Dh = E // num_heads

    def mm(a, w):
        return jnp.einsum("...i,io->...o", a.astype(_BF16), w.astype(_BF16),
                          preferred_element_type=_F32)

    def ln(v, w, b):
        mu = jnp.mean(v, axis=-1, keepdims=True)
        var = jnp.mean((v - mu) ** 2, axis=-1, keepdims=True)
        return (v - mu) * jax.lax.rsqrt(var + 1e-5) * w + b

    xp = x[:, :, :T * patch_size].reshape(B, C, T, patch_size)
    xp = jnp.transpose(xp, (0, 2, 1, 3)).reshape(B, T, C * patch_size)
    y = mm(xp, params["proj_w"].reshape(E, -1).T) + params["proj_b"]
    y = y + params["pos_embed"][:, :T]

    scale = 1.0 / float(np.sqrt(Dh))
    for lp in params["layers"]:
        qkv = mm(y, lp["wqkv"].T) + lp["bqkv"]
        q, k, v = qkv[..., :E], qkv[..., E:2 * E], qkv[..., 2 * E:]
        q = (q * scale).reshape(B, T, num_heads, Dh).transpose(0, 2, 1, 3)
        k = k.reshape(B, T, num_heads, Dh).transpose(0, 2, 1, 3)
        v = v.reshape(B, T, num_heads, Dh).transpose(0, 2, 1, 3)
        s = jnp.einsum("bhqd,bhkd->bhqk", q.astype(_BF16), k.astype(_BF16),
                       preferred_element_type=_F32)
        p = jax.nn.softmax(s, axis=-1)
        a = jnp.einsum("bhqk,bhkd->bhqd", p.astype(_BF16), v.astype(_BF16),
                       preferred_element_type=_F32)
        a = a.transpose(0, 2, 1, 3).reshape(B, T, E)
        a = mm(a, lp["wo"].T) + lp["bo"]
        y = ln(y + a, lp["ln1_w"], lp["ln1_b"])
        h = jnp.maximum(mm(y, lp["w1"].T) + lp["b1"], 0.0)
        f = mm(h, lp["w2"].T) + lp["b2"]
        y = ln(y + f, lp["ln2_w"], lp["ln2_b"])

    y = ln(y, params["norm_w"], params["norm_b"])
    return jnp.mean(y, axis=1)


# ----------------------------------------------------------------------------
# Deterministic parameter construction
# ----------------------------------------------------------------------------

def make_params(key, *, in_channels, embed_dim, num_layers, mlp_dim,
                patch_size, max_len):
    keys = iter(jax.random.split(key, 4 + 8 * num_layers))
    nrm = lambda k, shape, s=0.02: (s * jax.random.normal(k, shape)).astype(jnp.float32)

    params = {
        "proj_w": nrm(next(keys), (embed_dim, in_channels, patch_size), 0.1),
        "proj_b": nrm(next(keys), (embed_dim,), 0.1),
        "pos_embed": nrm(next(keys), (1, max_len, embed_dim), 1.0),
        "norm_w": jnp.ones((embed_dim,), jnp.float32),
        "norm_b": jnp.zeros((embed_dim,), jnp.float32),
        "layers": [],
    }
    for _ in range(num_layers):
        params["layers"].append({
            "wqkv": nrm(next(keys), (3 * embed_dim, embed_dim), 0.05),
            "bqkv": nrm(next(keys), (3 * embed_dim,), 0.05),
            "wo": nrm(next(keys), (embed_dim, embed_dim), 0.05),
            "bo": nrm(next(keys), (embed_dim,), 0.05),
            "ln1_w": jnp.ones((embed_dim,), jnp.float32),
            "ln1_b": jnp.zeros((embed_dim,), jnp.float32),
            "ln2_w": jnp.ones((embed_dim,), jnp.float32),
            "ln2_b": jnp.zeros((embed_dim,), jnp.float32),
            "w1": nrm(next(keys), (mlp_dim, embed_dim), 0.05),
            "b1": nrm(next(keys), (mlp_dim,), 0.05),
            "w2": nrm(next(keys), (embed_dim, mlp_dim), 0.05),
            "b2": nrm(next(keys), (embed_dim,), 0.05),
        })
    return params


# ----------------------------------------------------------------------------
# Main
# ----------------------------------------------------------------------------

if __name__ == "__main__":
    B, C, L = 2, 4, 80              # batch, EEG channels, time samples
    PATCH = 10                      # -> T = 8 tokens
    EMBED = 32
    HEADS = 4
    LAYERS = 2
    MLP = 64
    MAX_LEN = 256

    key = jax.random.PRNGKey(0)
    kx, kp = jax.random.split(key)
    x = jax.random.normal(kx, (B, C, L), dtype=jnp.float32)
    params = make_params(kp, in_channels=C, embed_dim=EMBED,
                         num_layers=LAYERS, mlp_dim=MLP,
                         patch_size=PATCH, max_len=MAX_LEN)

    fwd = jax.jit(functools.partial(eeg_transformer_encoder,
                                    patch_size=PATCH, num_heads=HEADS))
    out = jax.block_until_ready(fwd(x, params))

    ref = reference_forward(x, params, patch_size=PATCH, num_heads=HEADS)
    np.testing.assert_allclose(np.asarray(out), np.asarray(ref),
                               rtol=1e-2, atol=1e-2)

    assert out.shape == (B, EMBED)
    print("KERNEL_OK")
</pallas_src>

<mosaic_0001>
module attributes {stable_mosaic.version = 11 : i64} {
  func.func @fused_encoder_kernel(%arg0: i32, %arg1: memref<16x40xf32, #tpu.memory_space<vmem>>, %arg2: memref<40x32xbf16, #tpu.memory_space<vmem>>, %arg3: memref<1x32xf32, #tpu.memory_space<vmem>>, %arg4: memref<8x32xf32, #tpu.memory_space<vmem>>, %arg5: memref<16x16xf32, #tpu.memory_space<vmem>>, %arg6: memref<2x32x96xbf16, #tpu.memory_space<vmem>>, %arg7: memref<2x1x96xf32, #tpu.memory_space<vmem>>, %arg8: memref<2x4x8x32xbf16, #tpu.memory_space<vmem>>, %arg9: memref<2x1x32xf32, #tpu.memory_space<vmem>>, %arg10: memref<2x1x32xf32, #tpu.memory_space<vmem>>, %arg11: memref<2x1x32xf32, #tpu.memory_space<vmem>>, %arg12: memref<2x1x32xf32, #tpu.memory_space<vmem>>, %arg13: memref<2x1x32xf32, #tpu.memory_space<vmem>>, %arg14: memref<2x32x64xbf16, #tpu.memory_space<vmem>>, %arg15: memref<2x1x64xf32, #tpu.memory_space<vmem>>, %arg16: memref<2x64x32xbf16, #tpu.memory_space<vmem>>, %arg17: memref<2x1x32xf32, #tpu.memory_space<vmem>>, %arg18: memref<1x32xf32, #tpu.memory_space<vmem>>, %arg19: memref<1x32xf32, #tpu.memory_space<vmem>>, %arg20: memref<2x32xf32, #tpu.memory_space<vmem>>) attributes {dimension_semantics = [#tpu.dimension_semantics<arbitrary>], iteration_bounds = array<i64: 1>, scalar_prefetch = 0 : i64, scratch_operands = 0 : i64, tpu.core_type = #tpu.core_type<tc>, window_params = [{pipeline_mode = #tpu.pipeline_mode<synchronous>, transform_indices = @transform_0, window_bounds = array<i64: 16, 40>}, {pipeline_mode = #tpu.pipeline_mode<synchronous>, transform_indices = @transform_1, window_bounds = array<i64: 40, 32>}, {pipeline_mode = #tpu.pipeline_mode<synchronous>, transform_indices = @transform_2, window_bounds = array<i64: 1, 32>}, {pipeline_mode = #tpu.pipeline_mode<synchronous>, transform_indices = @transform_3, window_bounds = array<i64: 8, 32>}, {pipeline_mode = #tpu.pipeline_mode<synchronous>, transform_indices = @transform_4, window_bounds = array<i64: 16, 16>}, {pipeline_mode = #tpu.pipeline_mode<synchronous>, transform_indices = @transform_5, window_bounds = array<i64: 2, 32, 96>}, {pipeline_mode = #tpu.pipeline_mode<synchronous>, transform_indices = @transform_6, window_bounds = array<i64: 2, 1, 96>}, {pipeline_mode = #tpu.pipeline_mode<synchronous>, transform_indices = @transform_7, window_bounds = array<i64: 2, 4, 8, 32>}, {pipeline_mode = #tpu.pipeline_mode<synchronous>, transform_indices = @transform_8, window_bounds = array<i64: 2, 1, 32>}, {pipeline_mode = #tpu.pipeline_mode<synchronous>, transform_indices = @transform_9, window_bounds = array<i64: 2, 1, 32>}, {pipeline_mode = #tpu.pipeline_mode<synchronous>, transform_indices = @transform_10, window_bounds = array<i64: 2, 1, 32>}, {pipeline_mode = #tpu.pipeline_mode<synchronous>, transform_indices = @transform_11, window_bounds = array<i64: 2, 1, 32>}, {pipeline_mode = #tpu.pipeline_mode<synchronous>, transform_indices = @transform_12, window_bounds = array<i64: 2, 1, 32>}, {pipeline_mode = #tpu.pipeline_mode<synchronous>, transform_indices = @transform_13, window_bounds = array<i64: 2, 32, 64>}, {pipeline_mode = #tpu.pipeline_mode<synchronous>, transform_indices = @transform_14, window_bounds = array<i64: 2, 1, 64>}, {pipeline_mode = #tpu.pipeline_mode<synchronous>, transform_indices = @transform_15, window_bounds = array<i64: 2, 64, 32>}, {pipeline_mode = #tpu.pipeline_mode<synchronous>, transform_indices = @transform_16, window_bounds = array<i64: 2, 1, 32>}, {pipeline_mode = #tpu.pipeline_mode<synchronous>, transform_indices = @transform_17, window_bounds = array<i64: 1, 32>}, {pipeline_mode = #tpu.pipeline_mode<synchronous>, transform_indices = @transform_18, window_bounds = array<i64: 1, 32>}, {pipeline_mode = #tpu.pipeline_mode<synchronous>, transform_indices = @transform_19, window_bounds = array<i64: 2, 32>}]} {
    %c0 = arith.constant 0 : index
    %c0_0 = arith.constant 0 : index
    %0 = vector.load %arg1[%c0, %c0_0] : memref<16x40xf32, #tpu.memory_space<vmem>>, vector<16x40xf32>
    %1 = arith.truncf %0 : vector<16x40xf32> to vector<16x40xbf16>
    %c0_1 = arith.constant 0 : index
    %c0_2 = arith.constant 0 : index
    %2 = vector.load %arg2[%c0_1, %c0_2] : memref<40x32xbf16, #tpu.memory_space<vmem>>, vector<40x32xbf16>
    %cst = arith.constant dense<0.000000e+00> : vector<16x32xf32>
    %3 = tpu.matmul %1, %2, %cst {dimension_numbers = #tpu.dot_dimension_numbers<[1], [0], [0], [1], [0, 0, 1, 1], [], []>} : vector<16x40xbf16>, vector<40x32xbf16>, vector<16x32xf32> -> vector<16x32xf32>
    %c0_3 = arith.constant 0 : index
    %c0_4 = arith.constant 0 : index
    %4 = vector.load %arg3[%c0_3, %c0_4] : memref<1x32xf32, #tpu.memory_space<vmem>>, vector<1x32xf32>
    %5 = vector.broadcast %4 : vector<1x32xf32> to vector<16x32xf32>
    %6 = arith.addf %3, %5 : vector<16x32xf32>
    %c0_5 = arith.constant 0 : index
    %c0_6 = arith.constant 0 : index
    %7 = vector.load %arg4[%c0_5, %c0_6] : memref<8x32xf32, #tpu.memory_space<vmem>>, vector<8x32xf32>
    %8 = tpu.concatenate %7, %7 in 0 : vector<8x32xf32>, vector<8x32xf32> -> vector<16x32xf32>
    %9 = arith.addf %6, %8 : vector<16x32xf32>
    %c0_7 = arith.constant 0 : index
    %c0_8 = arith.constant 0 : index
    %10 = vector.load %arg5[%c0_7, %c0_8] : memref<16x16xf32, #tpu.memory_space<vmem>>, vector<16x16xf32>
    %c0_9 = arith.constant 0 : index
    %c0_10 = arith.constant 0 : index
    %c0_11 = arith.constant 0 : index
    %11 = vector.load %arg6[%c0_9, %c0_10, %c0_11] : memref<2x32x96xbf16, #tpu.memory_space<vmem>>, vector<1x32x96xbf16>
    %12 = vector.shape_cast %11 : vector<1x32x96xbf16> to vector<32x96xbf16>
    %c0_12 = arith.constant 0 : index
    %c0_13 = arith.constant 0 : index
    %c0_14 = arith.constant 0 : index
    %13 = vector.load %arg14[%c0_12, %c0_13, %c0_14] : memref<2x32x64xbf16, #tpu.memory_space<vmem>>, vector<1x32x64xbf16>
    %14 = vector.shape_cast %13 : vector<1x32x64xbf16> to vector<32x64xbf16>
    %c0_15 = arith.constant 0 : index
    %c0_16 = arith.constant 0 : index
    %c0_17 = arith.constant 0 : index
    %15 = vector.load %arg16[%c0_15, %c0_16, %c0_17] : memref<2x64x32xbf16, #tpu.memory_space<vmem>>, vector<1x64x32xbf16>
    %16 = vector.shape_cast %15 : vector<1x64x32xbf16> to vector<64x32xbf16>
    %17 = arith.truncf %9 : vector<16x32xf32> to vector<16x32xbf16>
    %cst_18 = arith.constant dense<0.000000e+00> : vector<16x96xf32>
    %18 = tpu.matmul %17, %12, %cst_18 {dimension_numbers = #tpu.dot_dimension_numbers<[1], [0], [0], [1], [0, 0, 1, 1], [], []>} : vector<16x32xbf16>, vector<32x96xbf16>, vector<16x96xf32> -> vector<16x96xf32>
    %c0_19 = arith.constant 0 : index
    %c0_20 = arith.constant 0 : index
    %c0_21 = arith.constant 0 : index
    %19 = vector.load %arg7[%c0_19, %c0_20, %c0_21] : memref<2x1x96xf32, #tpu.memory_space<vmem>>, vector<1x1x96xf32>
    %20 = vector.shape_cast %19 : vector<1x1x96xf32> to vector<1x96xf32>
    %21 = vector.broadcast %20 : vector<1x96xf32> to vector<16x96xf32>
    %22 = arith.addf %18, %21 : vector<16x96xf32>
    %cst_22 = arith.constant 0.000000e+00 : f32
    %23 = vector.broadcast %cst_22 : f32 to vector<16x32xf32>
    %24 = vector.extract_strided_slice %22 {offsets = [0, 0], sizes = [16, 8], strides = [1, 1]} : vector<16x96xf32> to vector<16x8xf32>
    %cst_23 = arith.constant 0.353553385 : f32
    %25 = vector.broadcast %cst_23 : f32 to vector<16x8xf32>
    %26 = arith.mulf %24, %25 : vector<16x8xf32>
    %27 = arith.truncf %26 : vector<16x8xf32> to vector<16x8xbf16>
    %28 = vector.extract_strided_slice %22 {offsets = [0, 32], sizes = [16, 8], strides = [1, 1]} : vector<16x96xf32> to vector<16x8xf32>
    %29 = arith.truncf %28 : vector<16x8xf32> to vector<16x8xbf16>
    %30 = vector.extract_strided_slice %22 {offsets = [0, 64], sizes = [16, 8], strides = [1, 1]} : vector<16x96xf32> to vector<16x8xf32>
    %31 = arith.truncf %30 : vector<16x8xf32> to vector<16x8xbf16>
    %cst_24 = arith.constant dense<0.000000e+00> : vector<16x16xf32>
    %32 = tpu.matmul %27, %29, %cst_24 {dimension_numbers = #tpu.dot_dimension_numbers<[1], [1], [0], [0], [0, 0, 1, 0], [], []>} : vector<16x8xbf16>, vector<16x8xbf16>, vector<16x16xf32> -> vector<16x16xf32>
    %33 = arith.addf %32, %10 : vector<16x16xf32>
    %cst_25 = arith.constant dense<0xFF800000> : vector<16xf32>
    %34 = vector.multi_reduction <maximumf>, %33, %cst_25 [1] : vector<16x16xf32> to vector<16xf32>
    %35 = vector.shape_cast %34 : vector<16xf32> to vector<16x1xf32>
    %36 = vector.broadcast %35 : vector<16x1xf32> to vector<16x16xf32>
    %37 = arith.subf %33, %36 : vector<16x16xf32>
    %38 = math.exp %37 : vector<16x16xf32>
    %cst_26 = arith.constant dense<0.000000e+00> : vector<16xf32>
    %39 = vector.multi_reduction <add>, %38, %cst_26 [1] : vector<16x16xf32> to vector<16xf32>
    %40 = vector.shape_cast %39 : vector<16xf32> to vector<16x1xf32>
    %41 = tpu.reciprocal %40 {approx = true} : vector<16x1xf32> -> vector<16x1xf32>
    %42 = vector.broadcast %41 : vector<16x1xf32> to vector<16x16xf32>
    %43 = arith.mulf %38, %42 : vector<16x16xf32>
    %44 = arith.truncf %43 : vector<16x16xf32> to vector<16x16xbf16>
    %cst_27 = arith.constant dense<0.000000e+00> : vector<16x8xf32>
    %45 = tpu.matmul %44, %31, %cst_27 {dimension_numbers = #tpu.dot_dimension_numbers<[1], [0], [0], [1], [0, 0, 1, 1], [], []>} : vector<16x16xbf16>, vector<16x8xbf16>, vector<16x8xf32> -> vector<16x8xf32>
    %46 = arith.truncf %45 : vector<16x8xf32> to vector<16x8xbf16>
    %c0_28 = arith.constant 0 : index
    %c0_29 = arith.constant 0 : index
    %c0_30 = arith.constant 0 : index
    %c0_31 = arith.constant 0 : index
    %47 = vector.load %arg8[%c0_28, %c0_29, %c0_30, %c0_31] : memref<2x4x8x32xbf16, #tpu.memory_space<vmem>>, vector<1x1x8x32xbf16>
    %48 = vector.shape_cast %47 : vector<1x1x8x32xbf16> to vector<8x32xbf16>
    %cst_32 = arith.constant dense<0.000000e+00> : vector<16x32xf32>
    %49 = tpu.matmul %46, %48, %cst_32 {dimension_numbers = #tpu.dot_dimension_numbers<[1], [0], [0], [1], [0, 0, 1, 1], [], []>} : vector<16x8xbf16>, vector<8x32xbf16>, vector<16x32xf32> -> vector<16x32xf32>
    %50 = arith.addf %23, %49 : vector<16x32xf32>
    %51 = vector.extract_strided_slice %22 {offsets = [0, 8], sizes = [16, 8], strides = [1, 1]} : vector<16x96xf32> to vector<16x8xf32>
    %cst_33 = arith.constant 0.353553385 : f32
    %52 = vector.broadcast %cst_33 : f32 to vector<16x8xf32>
    %53 = arith.mulf %51, %52 : vector<16x8xf32>
    %54 = arith.truncf %53 : vector<16x8xf32> to vector<16x8xbf16>
    %55 = vector.extract_strided_slice %22 {offsets = [0, 40], sizes = [16, 8], strides = [1, 1]} : vector<16x96xf32> to vector<16x8xf32>
    %56 = arith.truncf %55 : vector<16x8xf32> to vector<16x8xbf16>
    %57 = vector.extract_strided_slice %22 {offsets = [0, 72], sizes = [16, 8], strides = [1, 1]} : vector<16x96xf32> to vector<16x8xf32>
    %58 = arith.truncf %57 : vector<16x8xf32> to vector<16x8xbf16>
    %cst_34 = arith.constant dense<0.000000e+00> : vector<16x16xf32>
    %59 = tpu.matmul %54, %56, %cst_34 {dimension_numbers = #tpu.dot_dimension_numbers<[1], [1], [0], [0], [0, 0, 1, 0], [], []>} : vector<16x8xbf16>, vector<16x8xbf16>, vector<16x16xf32> -> vector<16x16xf32>
    %60 = arith.addf %59, %10 : vector<16x16xf32>
    %cst_35 = arith.constant dense<0xFF800000> : vector<16xf32>
    %61 = vector.multi_reduction <maximumf>, %60, %cst_35 [1] : vector<16x16xf32> to vector<16xf32>
    %62 = vector.shape_cast %61 : vector<16xf32> to vector<16x1xf32>
    %63 = vector.broadcast %62 : vector<16x1xf32> to vector<16x16xf32>
    %64 = arith.subf %60, %63 : vector<16x16xf32>
    %65 = math.exp %64 : vector<16x16xf32>
    %cst_36 = arith.constant dense<0.000000e+00> : vector<16xf32>
    %66 = vector.multi_reduction <add>, %65, %cst_36 [1] : vector<16x16xf32> to vector<16xf32>
    %67 = vector.shape_cast %66 : vector<16xf32> to vector<16x1xf32>
    %68 = tpu.reciprocal %67 {approx = true} : vector<16x1xf32> -> vector<16x1xf32>
    %69 = vector.broadcast %68 : vector<16x1xf32> to vector<16x16xf32>
    %70 = arith.mulf %65, %69 : vector<16x16xf32>
    %71 = arith.truncf %70 : vector<16x16xf32> to vector<16x16xbf16>
    %cst_37 = arith.constant dense<0.000000e+00> : vector<16x8xf32>
    %72 = tpu.matmul %71, %58, %cst_37 {dimension_numbers = #tpu.dot_dimension_numbers<[1], [0], [0], [1], [0, 0, 1, 1], [], []>} : vector<16x16xbf16>, vector<16x8xbf16>, vector<16x8xf32> -> vector<16x8xf32>
    %73 = arith.truncf %72 : vector<16x8xf32> to vector<16x8xbf16>
    %c0_38 = arith.constant 0 : index
    %c1 = arith.constant 1 : index
    %c0_39 = arith.constant 0 : index
    %c0_40 = arith.constant 0 : index
    %74 = vector.load %arg8[%c0_38, %c1, %c0_39, %c0_40] : memref<2x4x8x32xbf16, #tpu.memory_space<vmem>>, vector<1x1x8x32xbf16>
    %75 = vector.shape_cast %74 : vector<1x1x8x32xbf16> to vector<8x32xbf16>
    %cst_41 = arith.constant dense<0.000000e+00> : vector<16x32xf32>
    %76 = tpu.matmul %73, %75, %cst_41 {dimension_numbers = #tpu.dot_dimension_numbers<[1], [0], [0], [1], [0, 0, 1, 1], [], []>} : vector<16x8xbf16>, vector<8x32xbf16>, vector<16x32xf32> -> vector<16x32xf32>
    %77 = arith.addf %50, %76 : vector<16x32xf32>
    %78 = vector.extract_strided_slice %22 {offsets = [0, 16], sizes = [16, 8], strides = [1, 1]} : vector<16x96xf32> to vector<16x8xf32>
    %cst_42 = arith.constant 0.353553385 : f32
    %79 = vector.broadcast %cst_42 : f32 to vector<16x8xf32>
    %80 = arith.mulf %78, %79 : vector<16x8xf32>
    %81 = arith.truncf %80 : vector<16x8xf32> to vector<16x8xbf16>
    %82 = vector.extract_strided_slice %22 {offsets = [0, 48], sizes = [16, 8], strides = [1, 1]} : vector<16x96xf32> to vector<16x8xf32>
    %83 = arith.truncf %82 : vector<16x8xf32> to vector<16x8xbf16>
    %84 = vector.extract_strided_slice %22 {offsets = [0, 80], sizes = [16, 8], strides = [1, 1]} : vector<16x96xf32> to vector<16x8xf32>
    %85 = arith.truncf %84 : vector<16x8xf32> to vector<16x8xbf16>
    %cst_43 = arith.constant dense<0.000000e+00> : vector<16x16xf32>
    %86 = tpu.matmul %81, %83, %cst_43 {dimension_numbers = #tpu.dot_dimension_numbers<[1], [1], [0], [0], [0, 0, 1, 0], [], []>} : vector<16x8xbf16>, vector<16x8xbf16>, vector<16x16xf32> -> vector<16x16xf32>
    %87 = arith.addf %86, %10 : vector<16x16xf32>
    %cst_44 = arith.constant dense<0xFF800000> : vector<16xf32>
    %88 = vector.multi_reduction <maximumf>, %87, %cst_44 [1] : vector<16x16xf32> to vector<16xf32>
    %89 = vector.shape_cast %88 : vector<16xf32> to vector<16x1xf32>
    %90 = vector.broadcast %89 : vector<16x1xf32> to vector<16x16xf32>
    %91 = arith.subf %87, %90 : vector<16x16xf32>
    %92 = math.exp %91 : vector<16x16xf32>
    %cst_45 = arith.constant dense<0.000000e+00> : vector<16xf32>
    %93 = vector.multi_reduction <add>, %92, %cst_45 [1] : vector<16x16xf32> to vector<16xf32>
    %94 = vector.shape_cast %93 : vector<16xf32> to vector<16x1xf32>
    %95 = tpu.reciprocal %94 {approx = true} : vector<16x1xf32> -> vector<16x1xf32>
    %96 = vector.broadcast %95 : vector<16x1xf32> to vector<16x16xf32>
    %97 = arith.mulf %92, %96 : vector<16x16xf32>
    %98 = arith.truncf %97 : vector<16x16xf32> to vector<16x16xbf16>
    %cst_46 = arith.constant dense<0.000000e+00> : vector<16x8xf32>
    %99 = tpu.matmul %98, %85, %cst_46 {dimension_numbers = #tpu.dot_dimension_numbers<[1], [0], [0], [1], [0, 0, 1, 1], [], []>} : vector<16x16xbf16>, vector<16x8xbf16>, vector<16x8xf32> -> vector<16x8xf32>
    %100 = arith.truncf %99 : vector<16x8xf32> to vector<16x8xbf16>
    %c0_47 = arith.constant 0 : index
    %c2 = arith.constant 2 : index
    %c0_48 = arith.constant 0 : index
    %c0_49 = arith.constant 0 : index
    %101 = vector.load %arg8[%c0_47, %c2, %c0_48, %c0_49] : memref<2x4x8x32xbf16, #tpu.memory_space<vmem>>, vector<1x1x8x32xbf16>
    %102 = vector.shape_cast %101 : vector<1x1x8x32xbf16> to vector<8x32xbf16>
    %cst_50 = arith.constant dense<0.000000e+00> : vector<16x32xf32>
    %103 = tpu.matmul %100, %102, %cst_50 {dimension_numbers = #tpu.dot_dimension_numbers<[1], [0], [0], [1], [0, 0, 1, 1], [], []>} : vector<16x8xbf16>, vector<8x32xbf16>, vector<16x32xf32> -> vector<16x32xf32>
    %104 = arith.addf %77, %103 : vector<16x32xf32>
    %105 = vector.extract_strided_slice %22 {offsets = [0, 24], sizes = [16, 8], strides = [1, 1]} : vector<16x96xf32> to vector<16x8xf32>
    %cst_51 = arith.constant 0.353553385 : f32
    %106 = vector.broadcast %cst_51 : f32 to vector<16x8xf32>
    %107 = arith.mulf %105, %106 : vector<16x8xf32>
    %108 = arith.truncf %107 : vector<16x8xf32> to vector<16x8xbf16>
    %109 = vector.extract_strided_slice %22 {offsets = [0, 56], sizes = [16, 8], strides = [1, 1]} : vector<16x96xf32> to vector<16x8xf32>
    %110 = arith.truncf %109 : vector<16x8xf32> to vector<16x8xbf16>
    %111 = vector.extract_strided_slice %22 {offsets = [0, 88], sizes = [16, 8], strides = [1, 1]} : vector<16x96xf32> to vector<16x8xf32>
    %112 = arith.truncf %111 : vector<16x8xf32> to vector<16x8xbf16>
    %cst_52 = arith.constant dense<0.000000e+00> : vector<16x16xf32>
    %113 = tpu.matmul %108, %110, %cst_52 {dimension_numbers = #tpu.dot_dimension_numbers<[1], [1], [0], [0], [0, 0, 1, 0], [], []>} : vector<16x8xbf16>, vector<16x8xbf16>, vector<16x16xf32> -> vector<16x16xf32>
    %114 = arith.addf %113, %10 : vector<16x16xf32>
    %cst_53 = arith.constant dense<0xFF800000> : vector<16xf32>
    %115 = vector.multi_reduction <maximumf>, %114, %cst_53 [1] : vector<16x16xf32> to vector<16xf32>
    %116 = vector.shape_cast %115 : vector<16xf32> to vector<16x1xf32>
    %117 = vector.broadcast %116 : vector<16x1xf32> to vector<16x16xf32>
    %118 = arith.subf %114, %117 : vector<16x16xf32>
    %119 = math.exp %118 : vector<16x16xf32>
    %cst_54 = arith.constant dense<0.000000e+00> : vector<16xf32>
    %120 = vector.multi_reduction <add>, %119, %cst_54 [1] : vector<16x16xf32> to vector<16xf32>
    %121 = vector.shape_cast %120 : vector<16xf32> to vector<16x1xf32>
    %122 = tpu.reciprocal %121 {approx = true} : vector<16x1xf32> -> vector<16x1xf32>
    %123 = vector.broadcast %122 : vector<16x1xf32> to vector<16x16xf32>
    %124 = arith.mulf %119, %123 : vector<16x16xf32>
    %125 = arith.truncf %124 : vector<16x16xf32> to vector<16x16xbf16>
    %cst_55 = arith.constant dense<0.000000e+00> : vector<16x8xf32>
    %126 = tpu.matmul %125, %112, %cst_55 {dimension_numbers = #tpu.dot_dimension_numbers<[1], [0], [0], [1], [0, 0, 1, 1], [], []>} : vector<16x16xbf16>, vector<16x8xbf16>, vector<16x8xf32> -> vector<16x8xf32>
    %127 = arith.truncf %126 : vector<16x8xf32> to vector<16x8xbf16>
    %c0_56 = arith.constant 0 : index
    %c3 = arith.constant 3 : index
    %c0_57 = arith.constant 0 : index
    %c0_58 = arith.constant 0 : index
    %128 = vector.load %arg8[%c0_56, %c3, %c0_57, %c0_58] : memref<2x4x8x32xbf16, #tpu.memory_space<vmem>>, vector<1x1x8x32xbf16>
    %129 = vector.shape_cast %128 : vector<1x1x8x32xbf16> to vector<8x32xbf16>
    %cst_59 = arith.constant dense<0.000000e+00> : vector<16x32xf32>
    %130 = tpu.matmul %127, %129, %cst_59 {dimension_numbers = #tpu.dot_dimension_numbers<[1], [0], [0], [1], [0, 0, 1, 1], [], []>} : vector<16x8xbf16>, vector<8x32xbf16>, vector<16x32xf32> -> vector<16x32xf32>
    %131 = arith.addf %104, %130 : vector<16x32xf32>
    %c0_60 = arith.constant 0 : index
    %c0_61 = arith.constant 0 : index
    %c0_62 = arith.constant 0 : index
    %132 = vector.load %arg9[%c0_60, %c0_61, %c0_62] : memref<2x1x32xf32, #tpu.memory_space<vmem>>, vector<1x1x32xf32>
    %133 = vector.shape_cast %132 : vector<1x1x32xf32> to vector<1x32xf32>
    %134 = vector.broadcast %133 : vector<1x32xf32> to vector<16x32xf32>
    %135 = arith.addf %131, %134 : vector<16x32xf32>
    %136 = arith.addf %9, %135 : vector<16x32xf32>
    %c0_63 = arith.constant 0 : index
    %c0_64 = arith.constant 0 : index
    %c0_65 = arith.constant 0 : index
    %137 = vector.load %arg10[%c0_63, %c0_64, %c0_65] : memref<2x1x32xf32, #tpu.memory_space<vmem>>, vector<1x1x32xf32>
    %138 = vector.shape_cast %137 : vector<1x1x32xf32> to vector<1x32xf32>
    %c0_66 = arith.constant 0 : index
    %c0_67 = arith.constant 0 : index
    %c0_68 = arith.constant 0 : index
    %139 = vector.load %arg11[%c0_66, %c0_67, %c0_68] : memref<2x1x32xf32, #tpu.memory_space<vmem>>, vector<1x1x32xf32>
    %140 = vector.shape_cast %139 : vector<1x1x32xf32> to vector<1x32xf32>
    %cst_69 = arith.constant dense<0.000000e+00> : vector<16xf32>
    %141 = vector.multi_reduction <add>, %136, %cst_69 [1] : vector<16x32xf32> to vector<16xf32>
    %142 = vector.shape_cast %141 : vector<16xf32> to vector<16x1xf32>
    %cst_70 = arith.constant 3.200000e+01 : f32
    %143 = vector.broadcast %cst_70 : f32 to vector<16x1xf32>
    %144 = arith.divf %142, %143 : vector<16x1xf32>
    %145 = vector.broadcast %144 : vector<16x1xf32> to vector<16x32xf32>
    %146 = arith.subf %136, %145 : vector<16x32xf32>
    %147 = arith.mulf %146, %146 : vector<16x32xf32>
    %cst_71 = arith.constant dense<0.000000e+00> : vector<16xf32>
    %148 = vector.multi_reduction <add>, %147, %cst_71 [1] : vector<16x32xf32> to vector<16xf32>
    %149 = vector.shape_cast %148 : vector<16xf32> to vector<16x1xf32>
    %cst_72 = arith.constant 3.200000e+01 : f32
    %150 = vector.broadcast %cst_72 : f32 to vector<16x1xf32>
    %151 = arith.divf %149, %150 : vector<16x1xf32>
    %152 = vector.broadcast %144 : vector<16x1xf32> to vector<16x32xf32>
    %153 = arith.subf %136, %152 : vector<16x32xf32>
    %cst_73 = arith.constant 9.99999974E-6 : f32
    %154 = vector.broadcast %cst_73 : f32 to vector<16x1xf32>
    %155 = arith.addf %151, %154 : vector<16x1xf32>
    %156 = math.rsqrt %155 : vector<16x1xf32>
    %157 = vector.broadcast %156 : vector<16x1xf32> to vector<16x32xf32>
    %158 = arith.mulf %153, %157 : vector<16x32xf32>
    %159 = vector.broadcast %138 : vector<1x32xf32> to vector<16x32xf32>
    %160 = arith.mulf %158, %159 : vector<16x32xf32>
    %161 = vector.broadcast %140 : vector<1x32xf32> to vector<16x32xf32>
    %162 = arith.addf %160, %161 : vector<16x32xf32>
    %163 = arith.truncf %162 : vector<16x32xf32> to vector<16x32xbf16>
    %cst_74 = arith.constant dense<0.000000e+00> : vector<16x64xf32>
    %164 = tpu.matmul %163, %14, %cst_74 {dimension_numbers = #tpu.dot_dimension_numbers<[1], [0], [0], [1], [0, 0, 1, 1], [], []>} : vector<16x32xbf16>, vector<32x64xbf16>, vector<16x64xf32> -> vector<16x64xf32>
    %c0_75 = arith.constant 0 : index
    %c0_76 = arith.constant 0 : index
    %c0_77 = arith.constant 0 : index
    %165 = vector.load %arg15[%c0_75, %c0_76, %c0_77] : memref<2x1x64xf32, #tpu.memory_space<vmem>>, vector<1x1x64xf32>
    %166 = vector.shape_cast %165 : vector<1x1x64xf32> to vector<1x64xf32>
    %167 = vector.broadcast %166 : vector<1x64xf32> to vector<16x64xf32>
    %168 = arith.addf %164, %167 : vector<16x64xf32>
    %cst_78 = arith.constant 0.000000e+00 : f32
    %169 = vector.broadcast %cst_78 : f32 to vector<16x64xf32>
    %170 = arith.maximumf %168, %169 : vector<16x64xf32>
    %171 = arith.truncf %170 : vector<16x64xf32> to vector<16x64xbf16>
    %cst_79 = arith.constant dense<0.000000e+00> : vector<16x32xf32>
    %172 = tpu.matmul %171, %16, %cst_79 {dimension_numbers = #tpu.dot_dimension_numbers<[1], [0], [0], [1], [0, 0, 1, 1], [], []>} : vector<16x64xbf16>, vector<64x32xbf16>, vector<16x32xf32> -> vector<16x32xf32>
    %c0_80 = arith.constant 0 : index
    %c0_81 = arith.constant 0 : index
    %c0_82 = arith.constant 0 : index
    %173 = vector.load %arg17[%c0_80, %c0_81, %c0_82] : memref<2x1x32xf32, #tpu.memory_space<vmem>>, vector<1x1x32xf32>
    %174 = vector.shape_cast %173 : vector<1x1x32xf32> to vector<1x32xf32>
    %175 = vector.broadcast %174 : vector<1x32xf32> to vector<16x32xf32>
    %176 = arith.addf %172, %175 : vector<16x32xf32>
    %177 = arith.addf %162, %176 : vector<16x32xf32>
    %c0_83 = arith.constant 0 : index
    %c0_84 = arith.constant 0 : index
    %c0_85 = arith.constant 0 : index
    %178 = vector.load %arg12[%c0_83, %c0_84, %c0_85] : memref<2x1x32xf32, #tpu.memory_space<vmem>>, vector<1x1x32xf32>
    %179 = vector.shape_cast %178 : vector<1x1x32xf32> to vector<1x32xf32>
    %c0_86 = arith.constant 0 : index
    %c0_87 = arith.constant 0 : index
    %c0_88 = arith.constant 0 : index
    %180 = vector.load %arg13[%c0_86, %c0_87, %c0_88] : memref<2x1x32xf32, #tpu.memory_space<vmem>>, vector<1x1x32xf32>
    %181 = vector.shape_cast %180 : vector<1x1x32xf32> to vector<1x32xf32>
    %cst_89 = arith.constant dense<0.000000e+00> : vector<16xf32>
    %182 = vector.multi_reduction <add>, %177, %cst_89 [1] : vector<16x32xf32> to vector<16xf32>
    %183 = vector.shape_cast %182 : vector<16xf32> to vector<16x1xf32>
    %cst_90 = arith.constant 3.200000e+01 : f32
    %184 = vector.broadcast %cst_90 : f32 to vector<16x1xf32>
    %185 = arith.divf %183, %184 : vector<16x1xf32>
    %186 = vector.broadcast %185 : vector<16x1xf32> to vector<16x32xf32>
    %187 = arith.subf %177, %186 : vector<16x32xf32>
    %188 = arith.mulf %187, %187 : vector<16x32xf32>
    %cst_91 = arith.constant dense<0.000000e+00> : vector<16xf32>
    %189 = vector.multi_reduction <add>, %188, %cst_91 [1] : vector<16x32xf32> to vector<16xf32>
    %190 = vector.shape_cast %189 : vector<16xf32> to vector<16x1xf32>
    %cst_92 = arith.constant 3.200000e+01 : f32
    %191 = vector.broadcast %cst_92 : f32 to vector<16x1xf32>
    %192 = arith.divf %190, %191 : vector<16x1xf32>
    %193 = vector.broadcast %185 : vector<16x1xf32> to vector<16x32xf32>
    %194 = arith.subf %177, %193 : vector<16x32xf32>
    %cst_93 = arith.constant 9.99999974E-6 : f32
    %195 = vector.broadcast %cst_93 : f32 to vector<16x1xf32>
    %196 = arith.addf %192, %195 : vector<16x1xf32>
    %197 = math.rsqrt %196 : vector<16x1xf32>
    %198 = vector.broadcast %197 : vector<16x1xf32> to vector<16x32xf32>
    %199 = arith.mulf %194, %198 : vector<16x32xf32>
    %200 = vector.broadcast %179 : vector<1x32xf32> to vector<16x32xf32>
    %201 = arith.mulf %199, %200 : vector<16x32xf32>
    %202 = vector.broadcast %181 : vector<1x32xf32> to vector<16x32xf32>
    %203 = arith.addf %201, %202 : vector<16x32xf32>
    %c1_94 = arith.constant 1 : index
    %c0_95 = arith.constant 0 : index
    %c0_96 = arith.constant 0 : index
    %204 = vector.load %arg6[%c1_94, %c0_95, %c0_96] : memref<2x32x96xbf16, #tpu.memory_space<vmem>>, vector<1x32x96xbf16>
    %205 = vector.shape_cast %204 : vector<1x32x96xbf16> to vector<32x96xbf16>
    %c1_97 = arith.constant 1 : index
    %c0_98 = arith.constant 0 : index
    %c0_99 = arith.constant 0 : index
    %206 = vector.load %arg14[%c1_97, %c0_98, %c0_99] : memref<2x32x64xbf16, #tpu.memory_space<vmem>>, vector<1x32x64xbf16>
    %207 = vector.shape_cast %206 : vector<1x32x64xbf16> to vector<32x64xbf16>
    %c1_100 = arith.constant 1 : index
    %c0_101 = arith.constant 0 : index
    %c0_102 = arith.constant 0 : index
    %208 = vector.load %arg16[%c1_100, %c0_101, %c0_102] : memref<2x64x32xbf16, #tpu.memory_space<vmem>>, vector<1x64x32xbf16>
    %209 = vector.shape_cast %208 : vector<1x64x32xbf16> to vector<64x32xbf16>
    %210 = arith.truncf %203 : vector<16x32xf32> to vector<16x32xbf16>
    %cst_103 = arith.constant dense<0.000000e+00> : vector<16x96xf32>
    %211 = tpu.matmul %210, %205, %cst_103 {dimension_numbers = #tpu.dot_dimension_numbers<[1], [0], [0], [1], [0, 0, 1, 1], [], []>} : vector<16x32xbf16>, vector<32x96xbf16>, vector<16x96xf32> -> vector<16x96xf32>
    %c1_104 = arith.constant 1 : index
    %c0_105 = arith.constant 0 : index
    %c0_106 = arith.constant 0 : index
    %212 = vector.load %arg7[%c1_104, %c0_105, %c0_106] : memref<2x1x96xf32, #tpu.memory_space<vmem>>, vector<1x1x96xf32>
    %213 = vector.shape_cast %212 : vector<1x1x96xf32> to vector<1x96xf32>
    %214 = vector.broadcast %213 : vector<1x96xf32> to vector<16x96xf32>
    %215 = arith.addf %211, %214 : vector<16x96xf32>
    %cst_107 = arith.constant 0.000000e+00 : f32
    %216 = vector.broadcast %cst_107 : f32 to vector<16x32xf32>
    %217 = vector.extract_strided_slice %215 {offsets = [0, 0], sizes = [16, 8], strides = [1, 1]} : vector<16x96xf32> to vector<16x8xf32>
    %cst_108 = arith.constant 0.353553385 : f32
    %218 = vector.broadcast %cst_108 : f32 to vector<16x8xf32>
    %219 = arith.mulf %217, %218 : vector<16x8xf32>
    %220 = arith.truncf %219 : vector<16x8xf32> to vector<16x8xbf16>
    %221 = vector.extract_strided_slice %215 {offsets = [0, 32], sizes = [16, 8], strides = [1, 1]} : vector<16x96xf32> to vector<16x8xf32>
    %222 = arith.truncf %221 : vector<16x8xf32> to vector<16x8xbf16>
    %223 = vector.extract_strided_slice %215 {offsets = [0, 64], sizes = [16, 8], strides = [1, 1]} : vector<16x96xf32> to vector<16x8xf32>
    %224 = arith.truncf %223 : vector<16x8xf32> to vector<16x8xbf16>
    %cst_109 = arith.constant dense<0.000000e+00> : vector<16x16xf32>
    %225 = tpu.matmul %220, %222, %cst_109 {dimension_numbers = #tpu.dot_dimension_numbers<[1], [1], [0], [0], [0, 0, 1, 0], [], []>} : vector<16x8xbf16>, vector<16x8xbf16>, vector<16x16xf32> -> vector<16x16xf32>
    %226 = arith.addf %225, %10 : vector<16x16xf32>
    %cst_110 = arith.constant dense<0xFF800000> : vector<16xf32>
    %227 = vector.multi_reduction <maximumf>, %226, %cst_110 [1] : vector<16x16xf32> to vector<16xf32>
    %228 = vector.shape_cast %227 : vector<16xf32> to vector<16x1xf32>
    %229 = vector.broadcast %228 : vector<16x1xf32> to vector<16x16xf32>
    %230 = arith.subf %226, %229 : vector<16x16xf32>
    %231 = math.exp %230 : vector<16x16xf32>
    %cst_111 = arith.constant dense<0.000000e+00> : vector<16xf32>
    %232 = vector.multi_reduction <add>, %231, %cst_111 [1] : vector<16x16xf32> to vector<16xf32>
    %233 = vector.shape_cast %232 : vector<16xf32> to vector<16x1xf32>
    %234 = tpu.reciprocal %233 {approx = true} : vector<16x1xf32> -> vector<16x1xf32>
    %235 = vector.broadcast %234 : vector<16x1xf32> to vector<16x16xf32>
    %236 = arith.mulf %231, %235 : vector<16x16xf32>
    %237 = arith.truncf %236 : vector<16x16xf32> to vector<16x16xbf16>
    %cst_112 = arith.constant dense<0.000000e+00> : vector<16x8xf32>
    %238 = tpu.matmul %237, %224, %cst_112 {dimension_numbers = #tpu.dot_dimension_numbers<[1], [0], [0], [1], [0, 0, 1, 1], [], []>} : vector<16x16xbf16>, vector<16x8xbf16>, vector<16x8xf32> -> vector<16x8xf32>
    %239 = arith.truncf %238 : vector<16x8xf32> to vector<16x8xbf16>
    %c1_113 = arith.constant 1 : index
    %c0_114 = arith.constant 0 : index
    %c0_115 = arith.constant 0 : index
    %c0_116 = arith.constant 0 : index
    %240 = vector.load %arg8[%c1_113, %c0_114, %c0_115, %c0_116] : memref<2x4x8x32xbf16, #tpu.memory_space<vmem>>, vector<1x1x8x32xbf16>
    %241 = vector.shape_cast %240 : vector<1x1x8x32xbf16> to vector<8x32xbf16>
    %cst_117 = arith.constant dense<0.000000e+00> : vector<16x32xf32>
    %242 = tpu.matmul %239, %241, %cst_117 {dimension_numbers = #tpu.dot_dimension_numbers<[1], [0], [0], [1], [0, 0, 1, 1], [], []>} : vector<16x8xbf16>, vector<8x32xbf16>, vector<16x32xf32> -> vector<16x32xf32>
    %243 = arith.addf %216, %242 : vector<16x32xf32>
    %244 = vector.extract_strided_slice %215 {offsets = [0, 8], sizes = [16, 8], strides = [1, 1]} : vector<16x96xf32> to vector<16x8xf32>
    %cst_118 = arith.constant 0.353553385 : f32
    %245 = vector.broadcast %cst_118 : f32 to vector<16x8xf32>
    %246 = arith.mulf %244, %245 : vector<16x8xf32>
    %247 = arith.truncf %246 : vector<16x8xf32> to vector<16x8xbf16>
    %248 = vector.extract_strided_slice %215 {offsets = [0, 40], sizes = [16, 8], strides = [1, 1]} : vector<16x96xf32> to vector<16x8xf32>
    %249 = arith.truncf %248 : vector<16x8xf32> to vector<16x8xbf16>
    %250 = vector.extract_strided_slice %215 {offsets = [0, 72], sizes = [16, 8], strides = [1, 1]} : vector<16x96xf32> to vector<16x8xf32>
    %251 = arith.truncf %250 : vector<16x8xf32> to vector<16x8xbf16>
    %cst_119 = arith.constant dense<0.000000e+00> : vector<16x16xf32>
    %252 = tpu.matmul %247, %249, %cst_119 {dimension_numbers = #tpu.dot_dimension_numbers<[1], [1], [0], [0], [0, 0, 1, 0], [], []>} : vector<16x8xbf16>, vector<16x8xbf16>, vector<16x16xf32> -> vector<16x16xf32>
    %253 = arith.addf %252, %10 : vector<16x16xf32>
    %cst_120 = arith.constant dense<0xFF800000> : vector<16xf32>
    %254 = vector.multi_reduction <maximumf>, %253, %cst_120 [1] : vector<16x16xf32> to vector<16xf32>
    %255 = vector.shape_cast %254 : vector<16xf32> to vector<16x1xf32>
    %256 = vector.broadcast %255 : vector<16x1xf32> to vector<16x16xf32>
    %257 = arith.subf %253, %256 : vector<16x16xf32>
    %258 = math.exp %257 : vector<16x16xf32>
    %cst_121 = arith.constant dense<0.000000e+00> : vector<16xf32>
    %259 = vector.multi_reduction <add>, %258, %cst_121 [1] : vector<16x16xf32> to vector<16xf32>
    %260 = vector.shape_cast %259 : vector<16xf32> to vector<16x1xf32>
    %261 = tpu.reciprocal %260 {approx = true} : vector<16x1xf32> -> vector<16x1xf32>
    %262 = vector.broadcast %261 : vector<16x1xf32> to vector<16x16xf32>
    %263 = arith.mulf %258, %262 : vector<16x16xf32>
    %264 = arith.truncf %263 : vector<16x16xf32> to vector<16x16xbf16>
    %cst_122 = arith.constant dense<0.000000e+00> : vector<16x8xf32>
    %265 = tpu.matmul %264, %251, %cst_122 {dimension_numbers = #tpu.dot_dimension_numbers<[1], [0], [0], [1], [0, 0, 1, 1], [], []>} : vector<16x16xbf16>, vector<16x8xbf16>, vector<16x8xf32> -> vector<16x8xf32>
    %266 = arith.truncf %265 : vector<16x8xf32> to vector<16x8xbf16>
    %c1_123 = arith.constant 1 : index
    %c1_124 = arith.constant 1 : index
    %c0_125 = arith.constant 0 : index
    %c0_126 = arith.constant 0 : index
    %267 = vector.load %arg8[%c1_123, %c1_124, %c0_125, %c0_126] : memref<2x4x8x32xbf16, #tpu.memory_space<vmem>>, vector<1x1x8x32xbf16>
    %268 = vector.shape_cast %267 : vector<1x1x8x32xbf16> to vector<8x32xbf16>
    %cst_127 = arith.constant dense<0.000000e+00> : vector<16x32xf32>
    %269 = tpu.matmul %266, %268, %cst_127 {dimension_numbers = #tpu.dot_dimension_numbers<[1], [0], [0], [1], [0, 0, 1, 1], [], []>} : vector<16x8xbf16>, vector<8x32xbf16>, vector<16x32xf32> -> vector<16x32xf32>
    %270 = arith.addf %243, %269 : vector<16x32xf32>
    %271 = vector.extract_strided_slice %215 {offsets = [0, 16], sizes = [16, 8], strides = [1, 1]} : vector<16x96xf32> to vector<16x8xf32>
    %cst_128 = arith.constant 0.353553385 : f32
    %272 = vector.broadcast %cst_128 : f32 to vector<16x8xf32>
    %273 = arith.mulf %271, %272 : vector<16x8xf32>
    %274 = arith.truncf %273 : vector<16x8xf32> to vector<16x8xbf16>
    %275 = vector.extract_strided_slice %215 {offsets = [0, 48], sizes = [16, 8], strides = [1, 1]} : vector<16x96xf32> to vector<16x8xf32>
    %276 = arith.truncf %275 : vector<16x8xf32> to vector<16x8xbf16>
    %277 = vector.extract_strided_slice %215 {offsets = [0, 80], sizes = [16, 8], strides = [1, 1]} : vector<16x96xf32> to vector<16x8xf32>
    %278 = arith.truncf %277 : vector<16x8xf32> to vector<16x8xbf16>
    %cst_129 = arith.constant dense<0.000000e+00> : vector<16x16xf32>
    %279 = tpu.matmul %274, %276, %cst_129 {dimension_numbers = #tpu.dot_dimension_numbers<[1], [1], [0], [0], [0, 0, 1, 0], [], []>} : vector<16x8xbf16>, vector<16x8xbf16>, vector<16x16xf32> -> vector<16x16xf32>
    %280 = arith.addf %279, %10 : vector<16x16xf32>
    %cst_130 = arith.constant dense<0xFF800000> : vector<16xf32>
    %281 = vector.multi_reduction <maximumf>, %280, %cst_130 [1] : vector<16x16xf32> to vector<16xf32>
    %282 = vector.shape_cast %281 : vector<16xf32> to vector<16x1xf32>
    %283 = vector.broadcast %282 : vector<16x1xf32> to vector<16x16xf32>
    %284 = arith.subf %280, %283 : vector<16x16xf32>
    %285 = math.exp %284 : vector<16x16xf32>
    %cst_131 = arith.constant dense<0.000000e+00> : vector<16xf32>
    %286 = vector.multi_reduction <add>, %285, %cst_131 [1] : vector<16x16xf32> to vector<16xf32>
    %287 = vector.shape_cast %286 : vector<16xf32> to vector<16x1xf32>
    %288 = tpu.reciprocal %287 {approx = true} : vector<16x1xf32> -> vector<16x1xf32>
    %289 = vector.broadcast %288 : vector<16x1xf32> to vector<16x16xf32>
    %290 = arith.mulf %285, %289 : vector<16x16xf32>
    %291 = arith.truncf %290 : vector<16x16xf32> to vector<16x16xbf16>
    %cst_132 = arith.constant dense<0.000000e+00> : vector<16x8xf32>
    %292 = tpu.matmul %291, %278, %cst_132 {dimension_numbers = #tpu.dot_dimension_numbers<[1], [0], [0], [1], [0, 0, 1, 1], [], []>} : vector<16x16xbf16>, vector<16x8xbf16>, vector<16x8xf32> -> vector<16x8xf32>
    %293 = arith.truncf %292 : vector<16x8xf32> to vector<16x8xbf16>
    %c1_133 = arith.constant 1 : index
    %c2_134 = arith.constant 2 : index
    %c0_135 = arith.constant 0 : index
    %c0_136 = arith.constant 0 : index
    %294 = vector.load %arg8[%c1_133, %c2_134, %c0_135, %c0_136] : memref<2x4x8x32xbf16, #tpu.memory_space<vmem>>, vector<1x1x8x32xbf16>
    %295 = vector.shape_cast %294 : vector<1x1x8x32xbf16> to vector<8x32xbf16>
    %cst_137 = arith.constant dense<0.000000e+00> : vector<16x32xf32>
    %296 = tpu.matmul %293, %295, %cst_137 {dimension_numbers = #tpu.dot_dimension_numbers<[1], [0], [0], [1], [0, 0, 1, 1], [], []>} : vector<16x8xbf16>, vector<8x32xbf16>, vector<16x32xf32> -> vector<16x32xf32>
    %297 = arith.addf %270, %296 : vector<16x32xf32>
    %298 = vector.extract_strided_slice %215 {offsets = [0, 24], sizes = [16, 8], strides = [1, 1]} : vector<16x96xf32> to vector<16x8xf32>
    %cst_138 = arith.constant 0.353553385 : f32
    %299 = vector.broadcast %cst_138 : f32 to vector<16x8xf32>
    %300 = arith.mulf %298, %299 : vector<16x8xf32>
    %301 = arith.truncf %300 : vector<16x8xf32> to vector<16x8xbf16>
    %302 = vector.extract_strided_slice %215 {offsets = [0, 56], sizes = [16, 8], strides = [1, 1]} : vector<16x96xf32> to vector<16x8xf32>
    %303 = arith.truncf %302 : vector<16x8xf32> to vector<16x8xbf16>
    %304 = vector.extract_strided_slice %215 {offsets = [0, 88], sizes = [16, 8], strides = [1, 1]} : vector<16x96xf32> to vector<16x8xf32>
    %305 = arith.truncf %304 : vector<16x8xf32> to vector<16x8xbf16>
    %cst_139 = arith.constant dense<0.000000e+00> : vector<16x16xf32>
    %306 = tpu.matmul %301, %303, %cst_139 {dimension_numbers = #tpu.dot_dimension_numbers<[1], [1], [0], [0], [0, 0, 1, 0], [], []>} : vector<16x8xbf16>, vector<16x8xbf16>, vector<16x16xf32> -> vector<16x16xf32>
    %307 = arith.addf %306, %10 : vector<16x16xf32>
    %cst_140 = arith.constant dense<0xFF800000> : vector<16xf32>
    %308 = vector.multi_reduction <maximumf>, %307, %cst_140 [1] : vector<16x16xf32> to vector<16xf32>
    %309 = vector.shape_cast %308 : vector<16xf32> to vector<16x1xf32>
    %310 = vector.broadcast %309 : vector<16x1xf32> to vector<16x16xf32>
    %311 = arith.subf %307, %310 : vector<16x16xf32>
    %312 = math.exp %311 : vector<16x16xf32>
    %cst_141 = arith.constant dense<0.000000e+00> : vector<16xf32>
    %313 = vector.multi_reduction <add>, %312, %cst_141 [1] : vector<16x16xf32> to vector<16xf32>
    %314 = vector.shape_cast %313 : vector<16xf32> to vector<16x1xf32>
    %315 = tpu.reciprocal %314 {approx = true} : vector<16x1xf32> -> vector<16x1xf32>
    %316 = vector.broadcast %315 : vector<16x1xf32> to vector<16x16xf32>
    %317 = arith.mulf %312, %316 : vector<16x16xf32>
    %318 = arith.truncf %317 : vector<16x16xf32> to vector<16x16xbf16>
    %cst_142 = arith.constant dense<0.000000e+00> : vector<16x8xf32>
    %319 = tpu.matmul %318, %305, %cst_142 {dimension_numbers = #tpu.dot_dimension_numbers<[1], [0], [0], [1], [0, 0, 1, 1], [], []>} : vector<16x16xbf16>, vector<16x8xbf16>, vector<16x8xf32> -> vector<16x8xf32>
    %320 = arith.truncf %319 : vector<16x8xf32> to vector<16x8xbf16>
    %c1_143 = arith.constant 1 : index
    %c3_144 = arith.constant 3 : index
    %c0_145 = arith.constant 0 : index
    %c0_146 = arith.constant 0 : index
    %321 = vector.load %arg8[%c1_143, %c3_144, %c0_145, %c0_146] : memref<2x4x8x32xbf16, #tpu.memory_space<vmem>>, vector<1x1x8x32xbf16>
    %322 = vector.shape_cast %321 : vector<1x1x8x32xbf16> to vector<8x32xbf16>
    %cst_147 = arith.constant dense<0.000000e+00> : vector<16x32xf32>
    %323 = tpu.matmul %320, %322, %cst_147 {dimension_numbers = #tpu.dot_dimension_numbers<[1], [0], [0], [1], [0, 0, 1, 1], [], []>} : vector<16x8xbf16>, vector<8x32xbf16>, vector<16x32xf32> -> vector<16x32xf32>
    %324 = arith.addf %297, %323 : vector<16x32xf32>
    %c1_148 = arith.constant 1 : index
    %c0_149 = arith.constant 0 : index
    %c0_150 = arith.constant 0 : index
    %325 = vector.load %arg9[%c1_148, %c0_149, %c0_150] : memref<2x1x32xf32, #tpu.memory_space<vmem>>, vector<1x1x32xf32>
    %326 = vector.shape_cast %325 : vector<1x1x32xf32> to vector<1x32xf32>
    %327 = vector.broadcast %326 : vector<1x32xf32> to vector<16x32xf32>
    %328 = arith.addf %324, %327 : vector<16x32xf32>
    %329 = arith.addf %203, %328 : vector<16x32xf32>
    %c1_151 = arith.constant 1 : index
    %c0_152 = arith.constant 0 : index
    %c0_153 = arith.constant 0 : index
    %330 = vector.load %arg10[%c1_151, %c0_152, %c0_153] : memref<2x1x32xf32, #tpu.memory_space<vmem>>, vector<1x1x32xf32>
    %331 = vector.shape_cast %330 : vector<1x1x32xf32> to vector<1x32xf32>
    %c1_154 = arith.constant 1 : index
    %c0_155 = arith.constant 0 : index
    %c0_156 = arith.constant 0 : index
    %332 = vector.load %arg11[%c1_154, %c0_155, %c0_156] : memref<2x1x32xf32, #tpu.memory_space<vmem>>, vector<1x1x32xf32>
    %333 = vector.shape_cast %332 : vector<1x1x32xf32> to vector<1x32xf32>
    %cst_157 = arith.constant dense<0.000000e+00> : vector<16xf32>
    %334 = vector.multi_reduction <add>, %329, %cst_157 [1] : vector<16x32xf32> to vector<16xf32>
    %335 = vector.shape_cast %334 : vector<16xf32> to vector<16x1xf32>
    %cst_158 = arith.constant 3.200000e+01 : f32
    %336 = vector.broadcast %cst_158 : f32 to vector<16x1xf32>
    %337 = arith.divf %335, %336 : vector<16x1xf32>
    %338 = vector.broadcast %337 : vector<16x1xf32> to vector<16x32xf32>
    %339 = arith.subf %329, %338 : vector<16x32xf32>
    %340 = arith.mulf %339, %339 : vector<16x32xf32>
    %cst_159 = arith.constant dense<0.000000e+00> : vector<16xf32>
    %341 = vector.multi_reduction <add>, %340, %cst_159 [1] : vector<16x32xf32> to vector<16xf32>
    %342 = vector.shape_cast %341 : vector<16xf32> to vector<16x1xf32>
    %cst_160 = arith.constant 3.200000e+01 : f32
    %343 = vector.broadcast %cst_160 : f32 to vector<16x1xf32>
    %344 = arith.divf %342, %343 : vector<16x1xf32>
    %345 = vector.broadcast %337 : vector<16x1xf32> to vector<16x32xf32>
    %346 = arith.subf %329, %345 : vector<16x32xf32>
    %cst_161 = arith.constant 9.99999974E-6 : f32
    %347 = vector.broadcast %cst_161 : f32 to vector<16x1xf32>
    %348 = arith.addf %344, %347 : vector<16x1xf32>
    %349 = math.rsqrt %348 : vector<16x1xf32>
    %350 = vector.broadcast %349 : vector<16x1xf32> to vector<16x32xf32>
    %351 = arith.mulf %346, %350 : vector<16x32xf32>
    %352 = vector.broadcast %331 : vector<1x32xf32> to vector<16x32xf32>
    %353 = arith.mulf %351, %352 : vector<16x32xf32>
    %354 = vector.broadcast %333 : vector<1x32xf32> to vector<16x32xf32>
    %355 = arith.addf %353, %354 : vector<16x32xf32>
    %356 = arith.truncf %355 : vector<16x32xf32> to vector<16x32xbf16>
    %cst_162 = arith.constant dense<0.000000e+00> : vector<16x64xf32>
    %357 = tpu.matmul %356, %207, %cst_162 {dimension_numbers = #tpu.dot_dimension_numbers<[1], [0], [0], [1], [0, 0, 1, 1], [], []>} : vector<16x32xbf16>, vector<32x64xbf16>, vector<16x64xf32> -> vector<16x64xf32>
    %c1_163 = arith.constant 1 : index
    %c0_164 = arith.constant 0 : index
    %c0_165 = arith.constant 0 : index
    %358 = vector.load %arg15[%c1_163, %c0_164, %c0_165] : memref<2x1x64xf32, #tpu.memory_space<vmem>>, vector<1x1x64xf32>
    %359 = vector.shape_cast %358 : vector<1x1x64xf32> to vector<1x64xf32>
    %360 = vector.broadcast %359 : vector<1x64xf32> to vector<16x64xf32>
    %361 = arith.addf %357, %360 : vector<16x64xf32>
    %cst_166 = arith.constant 0.000000e+00 : f32
    %362 = vector.broadcast %cst_166 : f32 to vector<16x64xf32>
    %363 = arith.maximumf %361, %362 : vector<16x64xf32>
    %364 = arith.truncf %363 : vector<16x64xf32> to vector<16x64xbf16>
    %cst_167 = arith.constant dense<0.000000e+00> : vector<16x32xf32>
    %365 = tpu.matmul %364, %209, %cst_167 {dimension_numbers = #tpu.dot_dimension_numbers<[1], [0], [0], [1], [0, 0, 1, 1], [], []>} : vector<16x64xbf16>, vector<64x32xbf16>, vector<16x32xf32> -> vector<16x32xf32>
    %c1_168 = arith.constant 1 : index
    %c0_169 = arith.constant 0 : index
    %c0_170 = arith.constant 0 : index
    %366 = vector.load %arg17[%c1_168, %c0_169, %c0_170] : memref<2x1x32xf32, #tpu.memory_space<vmem>>, vector<1x1x32xf32>
    %367 = vector.shape_cast %366 : vector<1x1x32xf32> to vector<1x32xf32>
    %368 = vector.broadcast %367 : vector<1x32xf32> to vector<16x32xf32>
    %369 = arith.addf %365, %368 : vector<16x32xf32>
    %370 = arith.addf %355, %369 : vector<16x32xf32>
    %c1_171 = arith.constant 1 : index
    %c0_172 = arith.constant 0 : index
    %c0_173 = arith.constant 0 : index
    %371 = vector.load %arg12[%c1_171, %c0_172, %c0_173] : memref<2x1x32xf32, #tpu.memory_space<vmem>>, vector<1x1x32xf32>
    %372 = vector.shape_cast %371 : vector<1x1x32xf32> to vector<1x32xf32>
    %c1_174 = arith.constant 1 : index
    %c0_175 = arith.constant 0 : index
    %c0_176 = arith.constant 0 : index
    %373 = vector.load %arg13[%c1_174, %c0_175, %c0_176] : memref<2x1x32xf32, #tpu.memory_space<vmem>>, vector<1x1x32xf32>
    %374 = vector.shape_cast %373 : vector<1x1x32xf32> to vector<1x32xf32>
    %cst_177 = arith.constant dense<0.000000e+00> : vector<16xf32>
    %375 = vector.multi_reduction <add>, %370, %cst_177 [1] : vector<16x32xf32> to vector<16xf32>
    %376 = vector.shape_cast %375 : vector<16xf32> to vector<16x1xf32>
    %cst_178 = arith.constant 3.200000e+01 : f32
    %377 = vector.broadcast %cst_178 : f32 to vector<16x1xf32>
    %378 = arith.divf %376, %377 : vector<16x1xf32>
    %379 = vector.broadcast %378 : vector<16x1xf32> to vector<16x32xf32>
    %380 = arith.subf %370, %379 : vector<16x32xf32>
    %381 = arith.mulf %380, %380 : vector<16x32xf32>
    %cst_179 = arith.constant dense<0.000000e+00> : vector<16xf32>
    %382 = vector.multi_reduction <add>, %381, %cst_179 [1] : vector<16x32xf32> to vector<16xf32>
    %383 = vector.shape_cast %382 : vector<16xf32> to vector<16x1xf32>
    %cst_180 = arith.constant 3.200000e+01 : f32
    %384 = vector.broadcast %cst_180 : f32 to vector<16x1xf32>
    %385 = arith.divf %383, %384 : vector<16x1xf32>
    %386 = vector.broadcast %378 : vector<16x1xf32> to vector<16x32xf32>
    %387 = arith.subf %370, %386 : vector<16x32xf32>
    %cst_181 = arith.constant 9.99999974E-6 : f32
    %388 = vector.broadcast %cst_181 : f32 to vector<16x1xf32>
    %389 = arith.addf %385, %388 : vector<16x1xf32>
    %390 = math.rsqrt %389 : vector<16x1xf32>
    %391 = vector.broadcast %390 : vector<16x1xf32> to vector<16x32xf32>
    %392 = arith.mulf %387, %391 : vector<16x32xf32>
    %393 = vector.broadcast %372 : vector<1x32xf32> to vector<16x32xf32>
    %394 = arith.mulf %392, %393 : vector<16x32xf32>
    %395 = vector.broadcast %374 : vector<1x32xf32> to vector<16x32xf32>
    %396 = arith.addf %394, %395 : vector<16x32xf32>
    %c0_182 = arith.constant 0 : index
    %c0_183 = arith.constant 0 : index
    %397 = vector.load %arg18[%c0_182, %c0_183] : memref<1x32xf32, #tpu.memory_space<vmem>>, vector<1x32xf32>
    %c0_184 = arith.constant 0 : index
    %c0_185 = arith.constant 0 : index
    %398 = vector.load %arg19[%c0_184, %c0_185] : memref<1x32xf32, #tpu.memory_space<vmem>>, vector<1x32xf32>
    %cst_186 = arith.constant dense<0.000000e+00> : vector<16xf32>
    %399 = vector.multi_reduction <add>, %396, %cst_186 [1] : vector<16x32xf32> to vector<16xf32>
    %400 = vector.shape_cast %399 : vector<16xf32> to vector<16x1xf32>
    %cst_187 = arith.constant 3.200000e+01 : f32
    %401 = vector.broadcast %cst_187 : f32 to vector<16x1xf32>
    %402 = arith.divf %400, %401 : vector<16x1xf32>
    %403 = vector.broadcast %402 : vector<16x1xf32> to vector<16x32xf32>
    %404 = arith.subf %396, %403 : vector<16x32xf32>
    %405 = arith.mulf %404, %404 : vector<16x32xf32>
    %cst_188 = arith.constant dense<0.000000e+00> : vector<16xf32>
    %406 = vector.multi_reduction <add>, %405, %cst_188 [1] : vector<16x32xf32> to vector<16xf32>
    %407 = vector.shape_cast %406 : vector<16xf32> to vector<16x1xf32>
    %cst_189 = arith.constant 3.200000e+01 : f32
    %408 = vector.broadcast %cst_189 : f32 to vector<16x1xf32>
    %409 = arith.divf %407, %408 : vector<16x1xf32>
    %410 = vector.broadcast %402 : vector<16x1xf32> to vector<16x32xf32>
    %411 = arith.subf %396, %410 : vector<16x32xf32>
    %cst_190 = arith.constant 9.99999974E-6 : f32
    %412 = vector.broadcast %cst_190 : f32 to vector<16x1xf32>
    %413 = arith.addf %409, %412 : vector<16x1xf32>
    %414 = math.rsqrt %413 : vector<16x1xf32>
    %415 = vector.broadcast %414 : vector<16x1xf32> to vector<16x32xf32>
    %416 = arith.mulf %411, %415 : vector<16x32xf32>
    %417 = vector.broadcast %397 : vector<1x32xf32> to vector<16x32xf32>
    %418 = arith.mulf %416, %417 : vector<16x32xf32>
    %419 = vector.broadcast %398 : vector<1x32xf32> to vector<16x32xf32>
    %420 = arith.addf %418, %419 : vector<16x32xf32>
    %421 = vector.extract_strided_slice %420 {offsets = [0, 0], sizes = [8, 32], strides = [1, 1]} : vector<16x32xf32> to vector<8x32xf32>
    %cst_191 = arith.constant dense<0.000000e+00> : vector<32xf32>
    %422 = vector.multi_reduction <add>, %421, %cst_191 [0] : vector<8x32xf32> to vector<32xf32>
    %423 = vector.shape_cast %422 : vector<32xf32> to vector<1x32xf32>
    %cst_192 = arith.constant 8.000000e+00 : f32
    %424 = vector.broadcast %cst_192 : f32 to vector<1x32xf32>
    %425 = arith.divf %423, %424 : vector<1x32xf32>
    %426 = vector.extract_strided_slice %420 {offsets = [8, 0], sizes = [8, 32], strides = [1, 1]} : vector<16x32xf32> to vector<8x32xf32>
    %cst_193 = arith.constant dense<0.000000e+00> : vector<32xf32>
    %427 = vector.multi_reduction <add>, %426, %cst_193 [0] : vector<8x32xf32> to vector<32xf32>
    %428 = vector.shape_cast %427 : vector<32xf32> to vector<1x32xf32>
    %cst_194 = arith.constant 8.000000e+00 : f32
    %429 = vector.broadcast %cst_194 : f32 to vector<1x32xf32>
    %430 = arith.divf %428, %429 : vector<1x32xf32>
    %431 = tpu.concatenate %425, %430 in 0 : vector<1x32xf32>, vector<1x32xf32> -> vector<2x32xf32>
    %c0_195 = arith.constant 0 : index
    %c0_196 = arith.constant 0 : index
    %432 = vector.load %arg20[%c0_195, %c0_196] : memref<2x32xf32, #tpu.memory_space<vmem>>, vector<2x32xf32>
    tpu.vector_store %arg20[%c0_195, %c0_196], %431 {strides = array<i32>} : memref<2x32xf32, #tpu.memory_space<vmem>>, vector<2x32xf32>,
    return
  }
  func.func @transform_0(%arg0: i32) -> (i32, i32) {
    %c0_i32 = arith.constant 0 : i32
    %c0_i32_0 = arith.constant 0 : i32
    %c0_i32_1 = arith.constant 0 : i32
    return %c0_i32, %c0_i32_0 : i32, i32
  }
  func.func @transform_1(%arg0: i32) -> (i32, i32) {
    %c0_i32 = arith.constant 0 : i32
    %c0_i32_0 = arith.constant 0 : i32
    %c0_i32_1 = arith.constant 0 : i32
    return %c0_i32, %c0_i32_0 : i32, i32
  }
  func.func @transform_2(%arg0: i32) -> (i32, i32) {
    %c0_i32 = arith.constant 0 : i32
    %c0_i32_0 = arith.constant 0 : i32
    %c0_i32_1 = arith.constant 0 : i32
    return %c0_i32, %c0_i32_0 : i32, i32
  }
  func.func @transform_3(%arg0: i32) -> (i32, i32) {
    %c0_i32 = arith.constant 0 : i32
    %c0_i32_0 = arith.constant 0 : i32
    %c0_i32_1 = arith.constant 0 : i32
    return %c0_i32, %c0_i32_0 : i32, i32
  }
  func.func @transform_4(%arg0: i32) -> (i32, i32) {
    %c0_i32 = arith.constant 0 : i32
    %c0_i32_0 = arith.constant 0 : i32
    %c0_i32_1 = arith.constant 0 : i32
    return %c0_i32, %c0_i32_0 : i32, i32
  }
  func.func @transform_5(%arg0: i32) -> (i32, i32, i32) {
    %c0_i32 = arith.constant 0 : i32
    %c0_i32_0 = arith.constant 0 : i32
    %c0_i32_1 = arith.constant 0 : i32
    %c0_i32_2 = arith.constant 0 : i32
    return %c0_i32, %c0_i32_0, %c0_i32_1 : i32, i32, i32
  }
  func.func @transform_6(%arg0: i32) -> (i32, i32, i32) {
    %c0_i32 = arith.constant 0 : i32
    %c0_i32_0 = arith.constant 0 : i32
    %c0_i32_1 = arith.constant 0 : i32
    %c0_i32_2 = arith.constant 0 : i32
    return %c0_i32, %c0_i32_0, %c0_i32_1 : i32, i32, i32
  }
  func.func @transform_7(%arg0: i32) -> (i32, i32, i32, i32) {
    %c0_i32 = arith.constant 0 : i32
    %c0_i32_0 = arith.constant 0 : i32
    %c0_i32_1 = arith.constant 0 : i32
    %c0_i32_2 = arith.constant 0 : i32
    %c0_i32_3 = arith.constant 0 : i32
    return %c0_i32, %c0_i32_0, %c0_i32_1, %c0_i32_2 : i32, i32, i32, i32
  }
  func.func @transform_8(%arg0: i32) -> (i32, i32, i32) {
    %c0_i32 = arith.constant 0 : i32
    %c0_i32_0 = arith.constant 0 : i32
    %c0_i32_1 = arith.constant 0 : i32
    %c0_i32_2 = arith.constant 0 : i32
    return %c0_i32, %c0_i32_0, %c0_i32_1 : i32, i32, i32
  }
  func.func @transform_9(%arg0: i32) -> (i32, i32, i32) {
    %c0_i32 = arith.constant 0 : i32
    %c0_i32_0 = arith.constant 0 : i32
    %c0_i32_1 = arith.constant 0 : i32
    %c0_i32_2 = arith.constant 0 : i32
    return %c0_i32, %c0_i32_0, %c0_i32_1 : i32, i32, i32
  }
  func.func @transform_10(%arg0: i32) -> (i32, i32, i32) {
    %c0_i32 = arith.constant 0 : i32
    %c0_i32_0 = arith.constant 0 : i32
    %c0_i32_1 = arith.constant 0 : i32
    %c0_i32_2 = arith.constant 0 : i32
    return %c0_i32, %c0_i32_0, %c0_i32_1 : i32, i32, i32
  }
  func.func @transform_11(%arg0: i32) -> (i32, i32, i32) {
    %c0_i32 = arith.constant 0 : i32
    %c0_i32_0 = arith.constant 0 : i32
    %c0_i32_1 = arith.constant 0 : i32
    %c0_i32_2 = arith.constant 0 : i32
    return %c0_i32, %c0_i32_0, %c0_i32_1 : i32, i32, i32
  }
  func.func @transform_12(%arg0: i32) -> (i32, i32, i32) {
    %c0_i32 = arith.constant 0 : i32
    %c0_i32_0 = arith.constant 0 : i32
    %c0_i32_1 = arith.constant 0 : i32
    %c0_i32_2 = arith.constant 0 : i32
    return %c0_i32, %c0_i32_0, %c0_i32_1 : i32, i32, i32
  }
  func.func @transform_13(%arg0: i32) -> (i32, i32, i32) {
    %c0_i32 = arith.constant 0 : i32
    %c0_i32_0 = arith.constant 0 : i32
    %c0_i32_1 = arith.constant 0 : i32
    %c0_i32_2 = arith.constant 0 : i32
    return %c0_i32, %c0_i32_0, %c0_i32_1 : i32, i32, i32
  }
  func.func @transform_14(%arg0: i32) -> (i32, i32, i32) {
    %c0_i32 = arith.constant 0 : i32
    %c0_i32_0 = arith.constant 0 : i32
    %c0_i32_1 = arith.constant 0 : i32
    %c0_i32_2 = arith.constant 0 : i32
    return %c0_i32, %c0_i32_0, %c0_i32_1 : i32, i32, i32
  }
  func.func @transform_15(%arg0: i32) -> (i32, i32, i32) {
    %c0_i32 = arith.constant 0 : i32
    %c0_i32_0 = arith.constant 0 : i32
    %c0_i32_1 = arith.constant 0 : i32
    %c0_i32_2 = arith.constant 0 : i32
    return %c0_i32, %c0_i32_0, %c0_i32_1 : i32, i32, i32
  }
  func.func @transform_16(%arg0: i32) -> (i32, i32, i32) {
    %c0_i32 = arith.constant 0 : i32
    %c0_i32_0 = arith.constant 0 : i32
    %c0_i32_1 = arith.constant 0 : i32
    %c0_i32_2 = arith.constant 0 : i32
    return %c0_i32, %c0_i32_0, %c0_i32_1 : i32, i32, i32
  }
  func.func @transform_17(%arg0: i32) -> (i32, i32) {
    %c0_i32 = arith.constant 0 : i32
    %c0_i32_0 = arith.constant 0 : i32
    %c0_i32_1 = arith.constant 0 : i32
    return %c0_i32, %c0_i32_0 : i32, i32
  }
  func.func @transform_18(%arg0: i32) -> (i32, i32) {
    %c0_i32 = arith.constant 0 : i32
    %c0_i32_0 = arith.constant 0 : i32
    %c0_i32_1 = arith.constant 0 : i32
    return %c0_i32, %c0_i32_0 : i32, i32
  }
  func.func @transform_19(%arg0: i32) -> (i32, i32) {
    %c0_i32 = arith.constant 0 : i32
    %c0_i32_0 = arith.constant 0 : i32
    %c0_i32_1 = arith.constant 0 : i32
    return %c0_i32, %c0_i32_0 : i32, i32
  }
}

</mosaic_0001>

<llo_original>
// kernel: eeg_transformer_encoder.1
$region0: #{eeg_transformer_encoder.1}
  #allocation0 [shape = 'u32[]', space=smem, size = 0x4, offset = 0x4, fixed_abs, tag = 'smem constant byte address 0x4 - core index']
  #allocation1 [shape = 'u32[72,128]{1,0:T(1,128)}', space=vmem, size = 0x9000, scoped, tag = 'internal scratch']
  %s0 = inlined_call_operand.vmem [shape: f32[16,40], index: 0, kind: input, shape index: {}]
  %s1 = inlined_call_operand.vmem [shape: bf16[40,32], index: 1, kind: input, shape index: {}]
  %s2 = inlined_call_operand.vmem [shape: f32[1,32], index: 2, kind: input, shape index: {}]
  %s3 = inlined_call_operand.vmem [shape: f32[8,32], index: 3, kind: input, shape index: {}]
  %s4 = inlined_call_operand.vmem [shape: f32[16,16], index: 4, kind: input, shape index: {}]
  %s5 = inlined_call_operand.vmem [shape: bf16[2,32,96], index: 5, kind: input, shape index: {}]
  %s6 = inlined_call_operand.vmem [shape: f32[2,1,96], index: 6, kind: input, shape index: {}]
  %s7 = inlined_call_operand.vmem [shape: bf16[2,4,8,32], index: 7, kind: input, shape index: {}]
  %s8 = inlined_call_operand.vmem [shape: f32[2,1,32], index: 8, kind: input, shape index: {}]
  %s9 = inlined_call_operand.vmem [shape: f32[2,1,32], index: 9, kind: input, shape index: {}]
  %s10 = inlined_call_operand.vmem [shape: f32[2,1,32], index: 10, kind: input, shape index: {}]
  %s11 = inlined_call_operand.vmem [shape: f32[2,1,32], index: 11, kind: input, shape index: {}]
  %s12 = inlined_call_operand.vmem [shape: f32[2,1,32], index: 12, kind: input, shape index: {}]
  %s13 = inlined_call_operand.vmem [shape: bf16[2,32,64], index: 13, kind: input, shape index: {}]
  %s14 = inlined_call_operand.vmem [shape: f32[2,1,64], index: 14, kind: input, shape index: {}]
  %s15 = inlined_call_operand.vmem [shape: bf16[2,64,32], index: 15, kind: input, shape index: {}]
  %s16 = inlined_call_operand.vmem [shape: f32[2,1,32], index: 16, kind: input, shape index: {}]
  %s17 = inlined_call_operand.vmem [shape: f32[1,32], index: 17, kind: input, shape index: {}]
  %s18 = inlined_call_operand.vmem [shape: f32[1,32], index: 18, kind: input, shape index: {}]
  %s19 = inlined_call_operand.hbm [shape: f32[2,32], index: 19, kind: output, shape index: {}]
  %s20 = sld [smem:[#allocation0]]
  $region86: #{eeg_transformer_encoder.1} parent=0
    _
  %s22 = ssub.s32 1, %s20
  %s23 = scalar_select 0, %s22, %s20
  $region1: #{eeg_transformer_encoder.1} parent=0
    #allocation2 [shape = 'u8[1024]{0}', space=vmem, size = 0x400, scoped, tag = 'output window, operand 0, single buffered']
    #allocation3 [shape = 's32[1]{0}', space=sflag, size = 0x4, scoped, tag = 'scoped memory for eeg_transformer_encoder.1']
    %24 = vsyncpa [#allocation3], 0
    // Predicated region
    $region2: #{eeg_transformer_encoder.1} parent=1 // pred_check
      _
    $region3: #{eeg_transformer_encoder.1} parent=1 // pred_check_branch
      %26 = sbr.rel (0) target = $region5
    $region4: #{eeg_transformer_encoder.1} parent=1 // pred_region
      _
    $region5: #{eeg_transformer_encoder.1} parent=1 // pred_fallthru
      _
    // Predicated region
    $region6: #{eeg_transformer_encoder.1} parent=1 // pred_check
      _
    $region7: #{eeg_transformer_encoder.1} parent=1 // pred_check_branch
      %28 = sbr.rel (0) target = $region9
    $region8: #{eeg_transformer_encoder.1} parent=1 // pred_region
      _
    $region9: #{eeg_transformer_encoder.1} parent=1 // pred_fallthru
      _
    // Predicated region
    $region10: #{eeg_transformer_encoder.1} parent=1 // pred_check
      _
    $region11: #{eeg_transformer_encoder.1} parent=1 // pred_check_branch
      %30 = sbr.rel (0) target = $region13
    $region12: #{eeg_transformer_encoder.1} parent=1 // pred_region
      _
    $region13: #{eeg_transformer_encoder.1} parent=1 // pred_fallthru
      _
    // Predicated region
    $region14: #{eeg_transformer_encoder.1} parent=1 // pred_check
      _
    $region15: #{eeg_transformer_encoder.1} parent=1 // pred_check_branch
      %32 = sbr.rel (0) target = $region17
    $region16: #{eeg_transformer_encoder.1} parent=1 // pred_region
      _
    $region17: #{eeg_transformer_encoder.1} parent=1 // pred_fallthru
      _
    // Predicated region
    $region18: #{eeg_transformer_encoder.1} parent=1 // pred_check
      _
    $region19: #{eeg_transformer_encoder.1} parent=1 // pred_check_branch
      %34 = sbr.rel (0) target = $region21
    $region20: #{eeg_transformer_encoder.1} parent=1 // pred_region
      _
    $region21: #{eeg_transformer_encoder.1} parent=1 // pred_fallthru
      _
    // Predicated region
    $region22: #{eeg_transformer_encoder.1} parent=1 // pred_check
      _
    $region23: #{eeg_transformer_encoder.1} parent=1 // pred_check_branch
      %36 = sbr.rel (0) target = $region25
    $region24: #{eeg_transformer_encoder.1} parent=1 // pred_region
      _
    $region25: #{eeg_transformer_encoder.1} parent=1 // pred_fallthru
      _
    // Predicated region
    $region26: #{eeg_transformer_encoder.1} parent=1 // pred_check
      _
    $region27: #{eeg_transformer_encoder.1} parent=1 // pred_check_branch
      %38 = sbr.rel (0) target = $region29
    $region28: #{eeg_transformer_encoder.1} parent=1 // pred_region
      _
    $region29: #{eeg_transformer_encoder.1} parent=1 // pred_fallthru
      _
    // Predicated region
    $region30: #{eeg_transformer_encoder.1} parent=1 // pred_check
      _
    $region31: #{eeg_transformer_encoder.1} parent=1 // pred_check_branch
      %40 = sbr.rel (0) target = $region33
    $region32: #{eeg_transformer_encoder.1} parent=1 // pred_region
      _
    $region33: #{eeg_transformer_encoder.1} parent=1 // pred_fallthru
      _
    // Predicated region
    $region34: #{eeg_transformer_encoder.1} parent=1 // pred_check
      _
    $region35: #{eeg_transformer_encoder.1} parent=1 // pred_check_branch
      %42 = sbr.rel (0) target = $region37
    $region36: #{eeg_transformer_encoder.1} parent=1 // pred_region
      _
    $region37: #{eeg_transformer_encoder.1} parent=1 // pred_fallthru
      _
    // Predicated region
    $region38: #{eeg_transformer_encoder.1} parent=1 // pred_check
      _
    $region39: #{eeg_transformer_encoder.1} parent=1 // pred_check_branch
      %44 = sbr.rel (0) target = $region41
    $region40: #{eeg_transformer_encoder.1} parent=1 // pred_region
      _
    $region41: #{eeg_transformer_encoder.1} parent=1 // pred_fallthru
      _
    // Predicated region
    $region42: #{eeg_transformer_encoder.1} parent=1 // pred_check
      _
    $region43: #{eeg_transformer_encoder.1} parent=1 // pred_check_branch
      %46 = sbr.rel (0) target = $region45
    $region44: #{eeg_transformer_encoder.1} parent=1 // pred_region
      _
    $region45: #{eeg_transformer_encoder.1} parent=1 // pred_fallthru
      _
    // Predicated region
    $region46: #{eeg_transformer_encoder.1} parent=1 // pred_check
      _
    $region47: #{eeg_transformer_encoder.1} parent=1 // pred_check_branch
      %48 = sbr.rel (0) target = $region49
    $region48: #{eeg_transformer_encoder.1} parent=1 // pred_region
      _
    $region49: #{eeg_transformer_encoder.1} parent=1 // pred_fallthru
      _
    // Predicated region
    $region50: #{eeg_transformer_encoder.1} parent=1 // pred_check
      _
    $region51: #{eeg_transformer_encoder.1} parent=1 // pred_check_branch
      %50 = sbr.rel (0) target = $region53
    $region52: #{eeg_transformer_encoder.1} parent=1 // pred_region
      _
    $region53: #{eeg_transformer_encoder.1} parent=1 // pred_fallthru
      _
    // Predicated region
    $region54: #{eeg_transformer_encoder.1} parent=1 // pred_check
      _
    $region55: #{eeg_transformer_encoder.1} parent=1 // pred_check_branch
      %52 = sbr.rel (0) target = $region57
    $region56: #{eeg_transformer_encoder.1} parent=1 // pred_region
      _
    $region57: #{eeg_transformer_encoder.1} parent=1 // pred_fallthru
      _
    // Predicated region
    $region58: #{eeg_transformer_encoder.1} parent=1 // pred_check
      _
    $region59: #{eeg_transformer_encoder.1} parent=1 // pred_check_branch
      %54 = sbr.rel (0) target = $region61
    $region60: #{eeg_transformer_encoder.1} parent=1 // pred_region
      _
    $region61: #{eeg_transformer_encoder.1} parent=1 // pred_fallthru
      _
    // Predicated region
    $region62: #{eeg_transformer_encoder.1} parent=1 // pred_check
      _
    $region63: #{eeg_transformer_encoder.1} parent=1 // pred_check_branch
      %56 = sbr.rel (0) target = $region65
    $region64: #{eeg_transformer_encoder.1} parent=1 // pred_region
      _
    $region65: #{eeg_transformer_encoder.1} parent=1 // pred_fallthru
      _
    // Predicated region
    $region66: #{eeg_transformer_encoder.1} parent=1 // pred_check
      _
    $region67: #{eeg_transformer_encoder.1} parent=1 // pred_check_branch
      %58 = sbr.rel (0) target = $region69
    $region68: #{eeg_transformer_encoder.1} parent=1 // pred_region
      _
    $region69: #{eeg_transformer_encoder.1} parent=1 // pred_fallthru
      _
    // Predicated region
    $region70: #{eeg_transformer_encoder.1} parent=1 // pred_check
      _
    $region71: #{eeg_transformer_encoder.1} parent=1 // pred_check_branch
      %60 = sbr.rel (0) target = $region73
    $region72: #{eeg_transformer_encoder.1} parent=1 // pred_region
      _
    $region73: #{eeg_transformer_encoder.1} parent=1 // pred_fallthru
      _
    // Predicated region
    $region74: #{eeg_transformer_encoder.1} parent=1 // pred_check
      _
    $region75: #{eeg_transformer_encoder.1} parent=1 // pred_check_branch
      %62 = sbr.rel (0) target = $region77
    $region76: #{eeg_transformer_encoder.1} parent=1 // pred_region
      _
    $region77: #{eeg_transformer_encoder.1} parent=1 // pred_fallthru
      _
    %v64 = vld [vmem:[%s0] sm:$0xff]
    %v65 = vld [vmem:[%s0 + $0x8] sm:$0xff]
    %v66 = vpack.c.bf16 %v65, %v64
    %v67 = vld [vmem:[%s1] sm:$0xf]
    %v68 = vld [vmem:[%s1 + $0x4] sm:$0xf]
    %v69 = vld [vmem:[%s1 + $0x8] sm:$0xf]
    %v70 = vld [vmem:[%s1 + $0xc] sm:$0xf]
    %v71 = vld [vmem:[%s1 + $0x10] sm:$0xf]
    %v72 = vld [vmem:[%s2] sm:$0x1]
    %v74 = vperm.slane %v72, 0
    %v81 = vunpack.c.l.b16 %v67
    %v82 = vunpack.c.l.b16 %v68
    %v83 = vunpack.c.l.b16 %v69
    %v84 = vunpack.c.l.b16 %v70
    %v85 = vunpack.c.l.b16 %v71
    %v86 = vpack.c.b16 %v82, %v81
    %v87 = vpack.c.b16 %v84, %v83
    %v88 = vpack.c.b16 %v85, %v85
    %vm91 = vcmask 326656
    %v93 = vsel %vm91, %v66, 0
    %vm95 = vcmask 1043456
    %v97 = vsel %vm95, %v88, 0
    %99 = vmatpush.bf16.msra.mxu0 0
    %100 = vmatpush.bf16.msra.mxu0 0
    %101 = vmatpush.bf16.msra.mxu0 0
    %102 = vmatpush.bf16.msra.mxu0 0
    %103 = vmatpush.bf16.msra.mxu0 0
    %104 = vmatpush.bf16.msra.mxu0 %v97
    %105 = vmatpush.bf16.msra.mxu0 %v87
    %106 = vmatpush.bf16.msra.mxu0 %v86
    %107 = vmatmul.bf16.gmra.mxu0 %v93
    %v108 = vpop.f32.mrf.mxu0
    %v109 = vadd.f32 %v74, %v108
    %v110 = vpop.f32.mrf.mxu0
    %v111 = vadd.f32 %v74, %v110
    %112 = vdwg.mxu0
    %v113 = vld [vmem:[%s3] sm:$0xff]
    %v114 = vadd.f32 %v109, %v113
    %v115 = vadd.f32 %v111, %v113
    %v116 = vld [vmem:[%s4] sm:$0xff]
    %v117 = vld [vmem:[%s4 + $0x8] sm:$0xff]
    %v118 = vld [vmem:[%s5] sm:$0xf]
    %v119 = vld [vmem:[%s5 + $0x4] sm:$0xf]
    %v120 = vld [vmem:[%s5 + $0x8] sm:$0xf]
    %v121 = vld [vmem:[%s5 + $0xc] sm:$0xf]
    %v122 = vld [vmem:[%s13] sm:$0xf]
    %v123 = vld [vmem:[%s13 + $0x4] sm:$0xf]
    %v124 = vld [vmem:[%s13 + $0x8] sm:$0xf]
    %v125 = vld [vmem:[%s13 + $0xc] sm:$0xf]
    %v126 = vld [vmem:[%s15] sm:$0xf]
    %v127 = vld [vmem:[%s15 + $0x4] sm:$0xf]
    %v128 = vld [vmem:[%s15 + $0x8] sm:$0xf]
    %v129 = vld [vmem:[%s15 + $0xc] sm:$0xf]
    %v130 = vld [vmem:[%s15 + $0x10] sm:$0xf]
    %v131 = vld [vmem:[%s15 + $0x14] sm:$0xf]
    %v132 = vld [vmem:[%s15 + $0x18] sm:$0xf]
    %v133 = vld [vmem:[%s15 + $0x1c] sm:$0xf]
    %v134 = vpack.c.bf16 %v115, %v114
    %v135 = vld [vmem:[%s6] sm:$0x1]
    %v137 = vperm.slane %v135, 0
    %v143 = vunpack.c.l.b16 %v118
    %v144 = vunpack.c.l.b16 %v119
    %v145 = vunpack.c.l.b16 %v120
    %v146 = vunpack.c.l.b16 %v121
    %v147 = vpack.c.b16 %v144, %v143
    %v148 = vpack.c.b16 %v146, %v145
    %vm151 = vcmask 261120
    %v153 = vsel %vm151, %v134, 0
    %155 = vmatpush.bf16.msra.mxu0 0
    %156 = vmatpush.bf16.msra.mxu0 0
    %157 = vmatpush.bf16.msra.mxu0 0
    %158 = vmatpush.bf16.msra.mxu0 0
    %159 = vmatpush.bf16.msra.mxu0 0
    %160 = vmatpush.bf16.msra.mxu0 0
    %161 = vmatpush.bf16.msra.mxu0 %v148
    %162 = vmatpush.bf16.msra.mxu0 %v147
    %163 = vmatmul.bf16.gmra.mxu0 %v153
    %v164 = vpop.f32.mrf.mxu0
    %v165 = vadd.f32 %v137, %v164
    %v166 = vpop.f32.mrf.mxu0
    %v167 = vadd.f32 %v137, %v166
    %168 = vdwg.mxu0
    %v169 = vmul.f32 %v165, 0.35355338
    %v170 = vmul.f32 %v167, 0.35355338
    %v171 = vpack.c.bf16 %v170, %v169
    %v172 = vpack.c.bf16 %v167, %v165
    %174 = vrot.lane.b32.xlu0 %v172, 96
    %v175 = vpop.permute.xlu0 %174
    %vm176 = vcmask 64512
    %v178 = vsel %vm176, %v171, 0
    %v181 = vsel %vm176, %v175, 0
    %183 = vmatpush.bf16.xpose.msra.mxu0 0
    %184 = vmatpush.bf16.xpose.msra.mxu0 0
    %185 = vmatpush.bf16.xpose.msra.mxu0 0
    %186 = vmatpush.bf16.xpose.msra.mxu0 0
    %187 = vmatpush.bf16.xpose.msra.mxu0 0
    %188 = vmatpush.bf16.xpose.msra.mxu0 0
    %189 = vmatpush.bf16.xpose.msra.mxu0 0
    %190 = vmatpush.bf16.xpose.msra.mxu0 %v181
    %191 = vmatmul.bf16.gmra.mxu0 %v178
    %v192 = vpop.f32.mrf.mxu0
    %v193 = vadd.f32 %v116, %v192
    %v194 = vpop.f32.mrf.mxu0
    %v195 = vadd.f32 %v117, %v194
    %196 = vdwg.mxu0
    %vm197 = vcmask 130048
    %v198 = vsel %vm197, %v193, -inf
    %199 = vmax.xlane.f32.xlu0 %v198
    %v200 = vpop.xlane.xlu0 %199
    %v201 = vsel %vm197, %v195, -inf
    %202 = vmax.xlane.f32.xlu0 %v201
    %v203 = vpop.xlane.xlu0 %202
    %v204 = vsub.f32 %v193, %v200
    %v205 = vsub.f32 %v195, %v203
    %v206 = vmul.f32 %v204, 1.442695
    %v207 = vpow.pop %v206
    %v208 = vmul.f32 %v205, 1.442695
    %v209 = vpow.pop %v208
    %v210 = vsel %vm197, %v207, 0.0
    %211 = vadd.xlane.f32.xlu0 %v210
    %v212 = vpop.xlane.xlu0 %211
    %v213 = vsel %vm197, %v209, 0.0
    %214 = vadd.xlane.f32.xlu0 %v213
    %v215 = vpop.xlane.xlu0 %214
    %v216 = vrcp.pop %v212
    %v217 = vrcp.pop %v215
    %v218 = vmul.f32 %v207, %v216
    %v219 = vmul.f32 %v209, %v217
    %v220 = vpack.c.bf16 %v219, %v218
    %221 = vrot.lane.b32.xlu0 %v172, 64
    %v222 = vpop.permute.xlu0 %221
    %v225 = vsel %vm197, %v220, 0
    %227 = vmatpush.bf16.msra.mxu0 0
    %228 = vmatpush.bf16.msra.mxu0 0
    %229 = vmatpush.bf16.msra.mxu0 0
    %230 = vmatpush.bf16.msra.mxu0 0
    %231 = vmatpush.bf16.msra.mxu0 0
    %232 = vmatpush.bf16.msra.mxu0 0
    %233 = vmatpush.bf16.msra.mxu0 0
    %234 = vmatpush.bf16.msra.mxu0 %v222
    %235 = vmatmul.bf16.gmra.mxu0 %v225
    %v236 = vpop.f32.mrf.mxu0
    %v237 = vadd.f32 0.0, %v236
    %v238 = vpop.f32.mrf.mxu0
    %v239 = vadd.f32 0.0, %v238
    %240 = vdwg.mxu0
    %v241 = vpack.c.bf16 %v239, %v237
    %v242 = vld [vmem:[%s7] sm:$0xf]
    %244 = vrot.lane.b32.xlu0 %v171, 120
    %v245 = vpop.permute.xlu0 %244
    %246 = vrot.lane.b32.xlu0 %v172, 88
    %v247 = vpop.permute.xlu0 %246
    %v249 = vsel %vm176, %v245, 0
    %v252 = vsel %vm176, %v247, 0
    %254 = vmatpush.bf16.xpose.msra.mxu0 0
    %255 = vmatpush.bf16.xpose.msra.mxu0 0
    %256 = vmatpush.bf16.xpose.msra.mxu0 0
    %257 = vmatpush.bf16.xpose.msra.mxu0 0
    %258 = vmatpush.bf16.xpose.msra.mxu0 0
    %259 = vmatpush.bf16.xpose.msra.mxu0 0
    %260 = vmatpush.bf16.xpose.msra.mxu0 0
    %261 = vmatpush.bf16.xpose.msra.mxu0 %v252
    %262 = vmatmul.bf16.gmra.mxu0 %v249
    %v263 = vpop.f32.mrf.mxu0
    %v264 = vadd.f32 %v116, %v263
    %v265 = vpop.f32.mrf.mxu0
    %v266 = vadd.f32 %v117, %v265
    %267 = vdwg.mxu0
    %v268 = vsel %vm197, %v264, -inf
    %269 = vmax.xlane.f32.xlu0 %v268
    %v270 = vpop.xlane.xlu0 %269
    %v271 = vsel %vm197, %v266, -inf
    %272 = vmax.xlane.f32.xlu0 %v271
    %v273 = vpop.xlane.xlu0 %272
    %v274 = vsub.f32 %v264, %v270
    %v275 = vsub.f32 %v266, %v273
    %v276 = vmul.f32 %v274, 1.442695
    %v277 = vpow.pop %v276
    %v278 = vmul.f32 %v275, 1.442695
    %v279 = vpow.pop %v278
    %v280 = vsel %vm197, %v277, 0.0
    %281 = vadd.xlane.f32.xlu0 %v280
    %v282 = vpop.xlane.xlu0 %281
    %v283 = vsel %vm197, %v279, 0.0
    %284 = vadd.xlane.f32.xlu0 %v283
    %v285 = vpop.xlane.xlu0 %284
    %v286 = vrcp.pop %v282
    %v287 = vrcp.pop %v285
    %v288 = vmul.f32 %v277, %v286
    %v289 = vmul.f32 %v279, %v287
    %v290 = vpack.c.bf16 %v289, %v288
    %291 = vrot.lane.b32.xlu0 %v172, 56
    %v292 = vpop.permute.xlu0 %291
    %v295 = vsel %vm197, %v290, 0
    %297 = vmatpush.bf16.msra.mxu0 0
    %298 = vmatpush.bf16.msra.mxu0 0
    %299 = vmatpush.bf16.msra.mxu0 0
    %300 = vmatpush.bf16.msra.mxu0 0
    %301 = vmatpush.bf16.msra.mxu0 0
    %302 = vmatpush.bf16.msra.mxu0 0
    %303 = vmatpush.bf16.msra.mxu0 0
    %304 = vmatpush.bf16.msra.mxu0 %v292
    %305 = vmatmul.bf16.gmra.mxu0 %v295
    %v306 = vpop.f32.mrf.mxu0
    %v307 = vadd.f32 0.0, %v306
    %v308 = vpop.f32.mrf.mxu0
    %v309 = vadd.f32 0.0, %v308
    %310 = vdwg.mxu0
    %v311 = vpack.c.bf16 %v309, %v307
    %s312 = scalar_lea.vmem %s7, 4
    %v313 = vld [vmem:[%s312] sm:$0xf]
    %v315 = vsel %vm176, %v311, 0
    %v318 = vsel %vm95, %v313, 0
    %320 = vmatpush.bf16.msra.mxu0 0
    %321 = vmatpush.bf16.msra.mxu0 0
    %322 = vmatpush.bf16.msra.mxu0 0
    %323 = vmatpush.bf16.msra.mxu0 0
    %324 = vmatpush.bf16.msra.mxu0 0
    %325 = vmatpush.bf16.msra.mxu0 0
    %326 = vmatpush.bf16.msra.mxu0 0
    %327 = vmatpush.bf16.msra.mxu0 %v318
    %328 = vmatmul.bf16.gmra.mxu0 %v315
    %v329 = vpop.f32.mrf.mxu0
    %v330 = vadd.f32 0.0, %v329
    %v331 = vpop.f32.mrf.mxu0
    %v332 = vadd.f32 0.0, %v331
    %333 = vdwg.mxu0
    %v335 = vsel %vm176, %v241, 0
    %v338 = vsel %vm95, %v242, 0
    %340 = vmatpush.bf16.msra.mxu0 0
    %341 = vmatpush.bf16.msra.mxu0 0
    %342 = vmatpush.bf16.msra.mxu0 0
    %343 = vmatpush.bf16.msra.mxu0 0
    %344 = vmatpush.bf16.msra.mxu0 0
    %345 = vmatpush.bf16.msra.mxu0 0
    %346 = vmatpush.bf16.msra.mxu0 0
    %347 = vmatpush.bf16.msra.mxu0 %v338
    %348 = vmatmul.bf16.gmra.mxu0 %v335
    %v349 = vpop.f32.mrf.mxu0
    %v350 = vadd.f32 %v330, %v349
    %v351 = vpop.f32.mrf.mxu0
    %v352 = vadd.f32 %v332, %v351
    %353 = vdwg.mxu0
    %354 = vrot.lane.b32.xlu0 %v171, 112
    %v355 = vpop.permute.xlu0 %354
    %356 = vrot.lane.b32.xlu0 %v172, 80
    %v357 = vpop.permute.xlu0 %356
    %v359 = vsel %vm176, %v355, 0
    %v362 = vsel %vm176, %v357, 0
    %364 = vmatpush.bf16.xpose.msra.mxu0 0
    %365 = vmatpush.bf16.xpose.msra.mxu0 0
    %366 = vmatpush.bf16.xpose.msra.mxu0 0
    %367 = vmatpush.bf16.xpose.msra.mxu0 0
    %368 = vmatpush.bf16.xpose.msra.mxu0 0
    %369 = vmatpush.bf16.xpose.msra.mxu0 0
    %370 = vmatpush.bf16.xpose.msra.mxu0 0
    %371 = vmatpush.bf16.xpose.msra.mxu0 %v362
    %372 = vmatmul.bf16.gmra.mxu0 %v359
    %v373 = vpop.f32.mrf.mxu0
    %v374 = vadd.f32 %v116, %v373
    %v375 = vpop.f32.mrf.mxu0
    %v376 = vadd.f32 %v117, %v375
    %377 = vdwg.mxu0
    %v378 = vsel %vm197, %v374, -inf
    %379 = vmax.xlane.f32.xlu0 %v378
    %v380 = vpop.xlane.xlu0 %379
    %v381 = vsel %vm197, %v376, -inf
    %382 = vmax.xlane.f32.xlu0 %v381
    %v383 = vpop.xlane.xlu0 %382
    %v384 = vsub.f32 %v374, %v380
    %v385 = vsub.f32 %v376, %v383
    %v386 = vmul.f32 %v384, 1.442695
    %v387 = vpow.pop %v386
    %v388 = vmul.f32 %v385, 1.442695
    %v389 = vpow.pop %v388
    %v390 = vsel %vm197, %v387, 0.0
    %391 = vadd.xlane.f32.xlu0 %v390
    %v392 = vpop.xlane.xlu0 %391
    %v393 = vsel %vm197, %v389, 0.0
    %394 = vadd.xlane.f32.xlu0 %v393
    %v395 = vpop.xlane.xlu0 %394
    %v396 = vrcp.pop %v392
    %v397 = vrcp.pop %v395
    %v398 = vmul.f32 %v387, %v396
    %v399 = vmul.f32 %v389, %v397
    %v400 = vpack.c.bf16 %v399, %v398
    %401 = vrot.lane.b32.xlu0 %v172, 48
    %v402 = vpop.permute.xlu0 %401
    %v405 = vsel %vm197, %v400, 0
    %407 = vmatpush.bf16.msra.mxu0 0
    %408 = vmatpush.bf16.msra.mxu0 0
    %409 = vmatpush.bf16.msra.mxu0 0
    %410 = vmatpush.bf16.msra.mxu0 0
    %411 = vmatpush.bf16.msra.mxu0 0
    %412 = vmatpush.bf16.msra.mxu0 0
    %413 = vmatpush.bf16.msra.mxu0 0
    %414 = vmatpush.bf16.msra.mxu0 %v402
    %415 = vmatmul.bf16.gmra.mxu0 %v405
    %v416 = vpop.f32.mrf.mxu0
    %v417 = vadd.f32 0.0, %v416
    %v418 = vpop.f32.mrf.mxu0
    %v419 = vadd.f32 0.0, %v418
    %420 = vdwg.mxu0
    %v421 = vpack.c.bf16 %v419, %v417
    %s422 = scalar_lea.vmem %s7, 8
    %v423 = vld [vmem:[%s422] sm:$0xf]
    %v425 = vsel %vm176, %v421, 0
    %v428 = vsel %vm95, %v423, 0
    %430 = vmatpush.bf16.msra.mxu0 0
    %431 = vmatpush.bf16.msra.mxu0 0
    %432 = vmatpush.bf16.msra.mxu0 0
    %433 = vmatpush.bf16.msra.mxu0 0
    %434 = vmatpush.bf16.msra.mxu0 0
    %435 = vmatpush.bf16.msra.mxu0 0
    %436 = vmatpush.bf16.msra.mxu0 0
    %437 = vmatpush.bf16.msra.mxu0 %v428
    %438 = vmatmul.bf16.gmra.mxu0 %v425
    %v439 = vpop.f32.mrf.mxu0
    %v440 = vadd.f32 0.0, %v439
    %v441 = vpop.f32.mrf.mxu0
    %v442 = vadd.f32 0.0, %v441
    %443 = vdwg.mxu0
    %v444 = vadd.f32 %v350, %v440
    %v445 = vadd.f32 %v352, %v442
    %446 = vrot.lane.b32.xlu0 %v171, 104
    %v447 = vpop.permute.xlu0 %446
    %448 = vrot.lane.b32.xlu0 %v172, 72
    %v449 = vpop.permute.xlu0 %448
    %v451 = vsel %vm176, %v447, 0
    %v454 = vsel %vm176, %v449, 0
    %456 = vmatpush.bf16.xpose.msra.mxu0 0
    %457 = vmatpush.bf16.xpose.msra.mxu0 0
    %458 = vmatpush.bf16.xpose.msra.mxu0 0
    %459 = vmatpush.bf16.xpose.msra.mxu0 0
    %460 = vmatpush.bf16.xpose.msra.mxu0 0
    %461 = vmatpush.bf16.xpose.msra.mxu0 0
    %462 = vmatpush.bf16.xpose.msra.mxu0 0
    %463 = vmatpush.bf16.xpose.msra.mxu0 %v454
    %464 = vmatmul.bf16.gmra.mxu0 %v451
    %v465 = vpop.f32.mrf.mxu0
    %v466 = vadd.f32 %v116, %v465
    %v467 = vpop.f32.mrf.mxu0
    %v468 = vadd.f32 %v117, %v467
    %469 = vdwg.mxu0
    %v470 = vsel %vm197, %v466, -inf
    %471 = vmax.xlane.f32.xlu0 %v470
    %v472 = vpop.xlane.xlu0 %471
    %v473 = vsel %vm197, %v468, -inf
    %474 = vmax.xlane.f32.xlu0 %v473
    %v475 = vpop.xlane.xlu0 %474
    %v476 = vsub.f32 %v466, %v472
    %v477 = vsub.f32 %v468, %v475
    %v478 = vmul.f32 %v476, 1.442695
    %v479 = vpow.pop %v478
    %v480 = vmul.f32 %v477, 1.442695
    %v481 = vpow.pop %v480
    %v482 = vsel %vm197, %v479, 0.0
    %483 = vadd.xlane.f32.xlu0 %v482
    %v484 = vpop.xlane.xlu0 %483
    %v485 = vsel %vm197, %v481, 0.0
    %486 = vadd.xlane.f32.xlu0 %v485
    %v487 = vpop.xlane.xlu0 %486
    %v488 = vrcp.pop %v484
    %v489 = vrcp.pop %v487
    %v490 = vmul.f32 %v479, %v488
    %v491 = vmul.f32 %v481, %v489
    %v492 = vpack.c.bf16 %v491, %v490
    %493 = vrot.lane.b32.xlu0 %v172, 40
    %v494 = vpop.permute.xlu0 %493
    %v497 = vsel %vm197, %v492, 0
    %499 = vmatpush.bf16.msra.mxu0 0
    %500 = vmatpush.bf16.msra.mxu0 0
    %501 = vmatpush.bf16.msra.mxu0 0
    %502 = vmatpush.bf16.msra.mxu0 0
    %503 = vmatpush.bf16.msra.mxu0 0
    %504 = vmatpush.bf16.msra.mxu0 0
    %505 = vmatpush.bf16.msra.mxu0 0
    %506 = vmatpush.bf16.msra.mxu0 %v494
    %507 = vmatmul.bf16.gmra.mxu0 %v497
    %v508 = vpop.f32.mrf.mxu0
    %v509 = vadd.f32 0.0, %v508
    %v510 = vpop.f32.mrf.mxu0
    %v511 = vadd.f32 0.0, %v510
    %512 = vdwg.mxu0
    %v513 = vpack.c.bf16 %v511, %v509
    %s514 = scalar_lea.vmem %s7, 12
    %v515 = vld [vmem:[%s514] sm:$0xf]
    %v517 = vsel %vm176, %v513, 0
    %v520 = vsel %vm95, %v515, 0
    %522 = vmatpush.bf16.msra.mxu0 0
    %523 = vmatpush.bf16.msra.mxu0 0
    %524 = vmatpush.bf16.msra.mxu0 0
    %525 = vmatpush.bf16.msra.mxu0 0
    %526 = vmatpush.bf16.msra.mxu0 0
    %527 = vmatpush.bf16.msra.mxu0 0
    %528 = vmatpush.bf16.msra.mxu0 0
    %529 = vmatpush.bf16.msra.mxu0 %v520
    %530 = vmatmul.bf16.gmra.mxu0 %v517
    %v531 = vpop.f32.mrf.mxu0
    %v532 = vadd.f32 0.0, %v531
    %v533 = vpop.f32.mrf.mxu0
    %v534 = vadd.f32 0.0, %v533
    %535 = vdwg.mxu0
    %v536 = vadd.f32 %v444, %v532
    %v537 = vadd.f32 %v445, %v534
    %v538 = vld [vmem:[%s8] sm:$0x1]
    %v540 = vperm.slane %v538, 0
    %v542 = vadd.f32 %v536, %v540
    %v543 = vadd.f32 %v537, %v540
    %v544 = vadd.f32 %v114, %v542
    %v545 = vadd.f32 %v115, %v543
    %v546 = vld [vmem:[%s9] sm:$0x1]
    %v547 = vld [vmem:[%s10] sm:$0x1]
    %v548 = vsel %vm151, %v544, 0.0
    %549 = vadd.xlane.f32.xlu0 %v548
    %v550 = vpop.xlane.xlu0 %549
    %v551 = vsel %vm151, %v545, 0.0
    %552 = vadd.xlane.f32.xlu0 %v551
    %v553 = vpop.xlane.xlu0 %552
    %v554 = vrcp.pop 32.0
    %v555 = vmul.f32 32.0, %v554
    %v556 = vsub.f32 1.0, %v555
    %v557 = vmul.f32 %v554, %v556
    %v558 = vadd.f32 %v554, %v557
    %vm559 = vweird.f32 %v554
    %v560 = vsel %vm559, %v554, %v558
    %v561 = vmul.f32 %v550, %v560
    %v562 = vmul.f32 %v553, %v560
    %v563 = vsub.f32 %v544, %v561
    %v564 = vsub.f32 %v545, %v562
    %v565 = vmul.f32 %v563, %v563
    %v566 = vmul.f32 %v564, %v564
    %v567 = vsel %vm151, %v565, 0.0
    %568 = vadd.xlane.f32.xlu0 %v567
    %v569 = vpop.xlane.xlu0 %568
    %v570 = vsel %vm151, %v566, 0.0
    %571 = vadd.xlane.f32.xlu0 %v570
    %v572 = vpop.xlane.xlu0 %571
    %v573 = vmul.f32 %v569, %v560
    %v574 = vmul.f32 %v572, %v560
    %v575 = vadd.f32 %v573, 1e-05
    %v576 = vadd.f32 %v574, 1e-05
    %v577 = vrsqrt.pop %v575
    %v578 = vmul.f32 %v577, %v575
    %v579 = vmul.f32 %v578, %v577
    %v580 = vmul.f32 0.5, %v579
    %v581 = vsub.f32 1.5, %v580
    %v582 = vmul.f32 %v577, %v581
    %vm583 = vweird.f32 %v575
    %vm584 = vweird.f32 %v577
    %vm585 = vmor %vm583, %vm584
    %v586 = vsel %vm585, %v577, %v582
    %v587 = vrsqrt.pop %v576
    %v588 = vmul.f32 %v587, %v576
    %v589 = vmul.f32 %v588, %v587
    %v590 = vmul.f32 0.5, %v589
    %v591 = vsub.f32 1.5, %v590
    %v592 = vmul.f32 %v587, %v591
    %vm593 = vweird.f32 %v576
    %vm594 = vweird.f32 %v587
    %vm595 = vmor %vm593, %vm594
    %v596 = vsel %vm595, %v587, %v592
    %v597 = vmul.f32 %v563, %v586
    %v598 = vmul.f32 %v564, %v596
    %v600 = vperm.slane %v546, 0
    %v602 = vmul.f32 %v597, %v600
    %v603 = vmul.f32 %v598, %v600
    %v605 = vperm.slane %v547, 0
    %v607 = vadd.f32 %v602, %v605
    %v608 = vadd.f32 %v603, %v605
    %v609 = vpack.c.bf16 %v608, %v607
    %v610 = vld [vmem:[%s14] sm:$0x1]
    %v612 = vperm.slane %v610, 0
    %v618 = vunpack.c.l.b16 %v122
    %v619 = vunpack.c.l.b16 %v123
    %v620 = vunpack.c.l.b16 %v124
    %v621 = vunpack.c.l.b16 %v125
    %v622 = vpack.c.b16 %v619, %v618
    %v623 = vpack.c.b16 %v621, %v620
    %v627 = vsel %vm151, %v609, 0
    %629 = vmatpush.bf16.msra.mxu0 0
    %630 = vmatpush.bf16.msra.mxu0 0
    %631 = vmatpush.bf16.msra.mxu0 0
    %632 = vmatpush.bf16.msra.mxu0 0
    %633 = vmatpush.bf16.msra.mxu0 0
    %634 = vmatpush.bf16.msra.mxu0 0
    %635 = vmatpush.bf16.msra.mxu0 %v623
    %636 = vmatpush.bf16.msra.mxu0 %v622
    %637 = vmatmul.bf16.gmra.mxu0 %v627
    %v638 = vpop.f32.mrf.mxu0
    %v639 = vadd.f32 %v612, %v638
    %v640 = vpop.f32.mrf.mxu0
    %v641 = vadd.f32 %v612, %v640
    %642 = vdwg.mxu0
    %v643 = vmax.f32 %v639, 0.0
    %v644 = vmax.f32 %v641, 0.0
    %v645 = vpack.c.bf16 %v644, %v643
    %v646 = vld [vmem:[%s16] sm:$0x1]
    %v648 = vperm.slane %v646, 0
    %v658 = vunpack.c.l.b16 %v126
    %v659 = vunpack.c.l.b16 %v127
    %v660 = vunpack.c.l.b16 %v128
    %v661 = vunpack.c.l.b16 %v129
    %v662 = vunpack.c.l.b16 %v130
    %v663 = vunpack.c.l.b16 %v131
    %v664 = vunpack.c.l.b16 %v132
    %v665 = vunpack.c.l.b16 %v133
    %v666 = vpack.c.b16 %v659, %v658
    %v667 = vpack.c.b16 %v661, %v660
    %v668 = vpack.c.b16 %v663, %v662
    %v669 = vpack.c.b16 %v665, %v664
    %vm674 = vcmask 523264
    %v676 = vsel %vm674, %v645, 0
    %678 = vmatpush.bf16.msra.mxu0 0
    %679 = vmatpush.bf16.msra.mxu0 0
    %680 = vmatpush.bf16.msra.mxu0 0
    %681 = vmatpush.bf16.msra.mxu0 0
    %682 = vmatpush.bf16.msra.mxu0 %v669
    %683 = vmatpush.bf16.msra.mxu0 %v668
    %684 = vmatpush.bf16.msra.mxu0 %v667
    %685 = vmatpush.bf16.msra.mxu0 %v666
    %686 = vmatmul.bf16.gmra.mxu0 %v676
    %v687 = vpop.f32.mrf.mxu0
    %v688 = vadd.f32 %v648, %v687
    %v689 = vpop.f32.mrf.mxu0
    %v690 = vadd.f32 %v648, %v689
    %691 = vdwg.mxu0
    %v692 = vadd.f32 %v607, %v688
    %v693 = vadd.f32 %v608, %v690
    %v694 = vld [vmem:[%s11] sm:$0x1]
    %v695 = vld [vmem:[%s12] sm:$0x1]
    %v696 = vsel %vm151, %v692, 0.0
    %697 = vadd.xlane.f32.xlu0 %v696
    %v698 = vpop.xlane.xlu0 %697
    %v699 = vsel %vm151, %v693, 0.0
    %700 = vadd.xlane.f32.xlu0 %v699
    %v701 = vpop.xlane.xlu0 %700
    %v702 = vmul.f32 %v698, %v560
    %v703 = vmul.f32 %v701, %v560
    %v704 = vsub.f32 %v692, %v702
    %v705 = vsub.f32 %v693, %v703
    %v706 = vmul.f32 %v704, %v704
    %v707 = vmul.f32 %v705, %v705
    %v708 = vsel %vm151, %v706, 0.0
    %709 = vadd.xlane.f32.xlu0 %v708
    %v710 = vpop.xlane.xlu0 %709
    %v711 = vsel %vm151, %v707, 0.0
    %712 = vadd.xlane.f32.xlu0 %v711
    %v713 = vpop.xlane.xlu0 %712
    %v714 = vmul.f32 %v710, %v560
    %v715 = vmul.f32 %v713, %v560
    %v716 = vadd.f32 %v714, 1e-05
    %v717 = vadd.f32 %v715, 1e-05
    %v718 = vrsqrt.pop %v716
    %v719 = vmul.f32 %v718, %v716
    %v720 = vmul.f32 %v719, %v718
    %v721 = vmul.f32 0.5, %v720
    %v722 = vsub.f32 1.5, %v721
    %v723 = vmul.f32 %v718, %v722
    %vm724 = vweird.f32 %v716
    %vm725 = vweird.f32 %v718
    %vm726 = vmor %vm724, %vm725
    %v727 = vsel %vm726, %v718, %v723
    %v728 = vrsqrt.pop %v717
    %v729 = vmul.f32 %v728, %v717
    %v730 = vmul.f32 %v729, %v728
    %v731 = vmul.f32 0.5, %v730
    %v732 = vsub.f32 1.5, %v731
    %v733 = vmul.f32 %v728, %v732
    %vm734 = vweird.f32 %v717
    %vm735 = vweird.f32 %v728
    %vm736 = vmor %vm734, %vm735
    %v737 = vsel %vm736, %v728, %v733
    %v738 = vmul.f32 %v704, %v727
    %v739 = vmul.f32 %v705, %v737
    %v741 = vperm.slane %v694, 0
    %v743 = vmul.f32 %v738, %v741
    %v744 = vmul.f32 %v739, %v741
    %v746 = vperm.slane %v695, 0
    %v748 = vadd.f32 %v743, %v746
    %v749 = vadd.f32 %v744, %v746
    %s750 = scalar_lea.vmem %s5, 16
    %v751 = vld [vmem:[%s750] sm:$0xf]
    %v752 = vld [vmem:[%s750 + $0x4] sm:$0xf]
    %v753 = vld [vmem:[%s750 + $0x8] sm:$0xf]
    %v754 = vld [vmem:[%s750 + $0xc] sm:$0xf]
    %s755 = scalar_lea.vmem %s13, 16
    %v756 = vld [vmem:[%s755] sm:$0xf]
    %v757 = vld [vmem:[%s755 + $0x4] sm:$0xf]
    %v758 = vld [vmem:[%s755 + $0x8] sm:$0xf]
    %v759 = vld [vmem:[%s755 + $0xc] sm:$0xf]
    %s760 = scalar_lea.vmem %s15, 32
    %v761 = vld [vmem:[%s760] sm:$0xf]
    %v762 = vld [vmem:[%s760 + $0x4] sm:$0xf]
    %v763 = vld [vmem:[%s760 + $0x8] sm:$0xf]
    %v764 = vld [vmem:[%s760 + $0xc] sm:$0xf]
    %v765 = vld [vmem:[%s760 + $0x10] sm:$0xf]
    %v766 = vld [vmem:[%s760 + $0x14] sm:$0xf]
    %v767 = vld [vmem:[%s760 + $0x18] sm:$0xf]
    %v768 = vld [vmem:[%s760 + $0x1c] sm:$0xf]
    %v769 = vpack.c.bf16 %v749, %v748
    %s770 = scalar_lea.vmem %s6, 1
    %v771 = vld [vmem:[%s770] sm:$0x1]
    %v773 = vperm.slane %v771, 0
    %v779 = vunpack.c.l.b16 %v751
    %v780 = vunpack.c.l.b16 %v752
    %v781 = vunpack.c.l.b16 %v753
    %v782 = vunpack.c.l.b16 %v754
    %v783 = vpack.c.b16 %v780, %v779
    %v784 = vpack.c.b16 %v782, %v781
    %v788 = vsel %vm151, %v769, 0
    %790 = vmatpush.bf16.msra.mxu0 0
    %791 = vmatpush.bf16.msra.mxu0 0
    %792 = vmatpush.bf16.msra.mxu0 0
    %793 = vmatpush.bf16.msra.mxu0 0
    %794 = vmatpush.bf16.msra.mxu0 0
    %795 = vmatpush.bf16.msra.mxu0 0
    %796 = vmatpush.bf16.msra.mxu0 %v784
    %797 = vmatpush.bf16.msra.mxu0 %v783
    %798 = vmatmul.bf16.gmra.mxu0 %v788
    %v799 = vpop.f32.mrf.mxu0
    %v800 = vadd.f32 %v773, %v799
    %v801 = vpop.f32.mrf.mxu0
    %v802 = vadd.f32 %v773, %v801
    %803 = vdwg.mxu0
    %v804 = vmul.f32 %v800, 0.35355338
    %v805 = vmul.f32 %v802, 0.35355338
    %v806 = vpack.c.bf16 %v805, %v804
    %v807 = vpack.c.bf16 %v802, %v800
    %809 = vrot.lane.b32.xlu0 %v807, 96
    %v810 = vpop.permute.xlu0 %809
    %v812 = vsel %vm176, %v806, 0
    %v815 = vsel %vm176, %v810, 0
    %817 = vmatpush.bf16.xpose.msra.mxu0 0
    %818 = vmatpush.bf16.xpose.msra.mxu0 0
    %819 = vmatpush.bf16.xpose.msra.mxu0 0
    %820 = vmatpush.bf16.xpose.msra.mxu0 0
    %821 = vmatpush.bf16.xpose.msra.mxu0 0
    %822 = vmatpush.bf16.xpose.msra.mxu0 0
    %823 = vmatpush.bf16.xpose.msra.mxu0 0
    %824 = vmatpush.bf16.xpose.msra.mxu0 %v815
    %825 = vmatmul.bf16.gmra.mxu0 %v812
    %v826 = vpop.f32.mrf.mxu0
    %v827 = vadd.f32 %v116, %v826
    %v828 = vpop.f32.mrf.mxu0
    %v829 = vadd.f32 %v117, %v828
    %830 = vdwg.mxu0
    %v831 = vsel %vm197, %v827, -inf
    %832 = vmax.xlane.f32.xlu0 %v831
    %v833 = vpop.xlane.xlu0 %832
    %v834 = vsel %vm197, %v829, -inf
    %835 = vmax.xlane.f32.xlu0 %v834
    %v836 = vpop.xlane.xlu0 %835
    %v837 = vsub.f32 %v827, %v833
    %v838 = vsub.f32 %v829, %v836
    %v839 = vmul.f32 %v837, 1.442695
    %v840 = vpow.pop %v839
    %v841 = vmul.f32 %v838, 1.442695
    %v842 = vpow.pop %v841
    %v843 = vsel %vm197, %v840, 0.0
    %844 = vadd.xlane.f32.xlu0 %v843
    %v845 = vpop.xlane.xlu0 %844
    %v846 = vsel %vm197, %v842, 0.0
    %847 = vadd.xlane.f32.xlu0 %v846
    %v848 = vpop.xlane.xlu0 %847
    %v849 = vrcp.pop %v845
    %v850 = vrcp.pop %v848
    %v851 = vmul.f32 %v840, %v849
    %v852 = vmul.f32 %v842, %v850
    %v853 = vpack.c.bf16 %v852, %v851
    %854 = vrot.lane.b32.xlu0 %v807, 64
    %v855 = vpop.permute.xlu0 %854
    %v858 = vsel %vm197, %v853, 0
    %860 = vmatpush.bf16.msra.mxu0 0
    %861 = vmatpush.bf16.msra.mxu0 0
    %862 = vmatpush.bf16.msra.mxu0 0
    %863 = vmatpush.bf16.msra.mxu0 0
    %864 = vmatpush.bf16.msra.mxu0 0
    %865 = vmatpush.bf16.msra.mxu0 0
    %866 = vmatpush.bf16.msra.mxu0 0
    %867 = vmatpush.bf16.msra.mxu0 %v855
    %868 = vmatmul.bf16.gmra.mxu0 %v858
    %v869 = vpop.f32.mrf.mxu0
    %v870 = vadd.f32 0.0, %v869
    %v871 = vpop.f32.mrf.mxu0
    %v872 = vadd.f32 0.0, %v871
    %873 = vdwg.mxu0
    %v874 = vpack.c.bf16 %v872, %v870
    %s875 = scalar_lea.vmem %s7, 16
    %v876 = vld [vmem:[%s875] sm:$0xf]
    %878 = vrot.lane.b32.xlu0 %v806, 120
    %v879 = vpop.permute.xlu0 %878
    %880 = vrot.lane.b32.xlu0 %v807, 88
    %v881 = vpop.permute.xlu0 %880
    %v883 = vsel %vm176, %v879, 0
    %v886 = vsel %vm176, %v881, 0
    %888 = vmatpush.bf16.xpose.msra.mxu0 0
    %889 = vmatpush.bf16.xpose.msra.mxu0 0
    %890 = vmatpush.bf16.xpose.msra.mxu0 0
    %891 = vmatpush.bf16.xpose.msra.mxu0 0
    %892 = vmatpush.bf16.xpose.msra.mxu0 0
    %893 = vmatpush.bf16.xpose.msra.mxu0 0
    %894 = vmatpush.bf16.xpose.msra.mxu0 0
    %895 = vmatpush.bf16.xpose.msra.mxu0 %v886
    %896 = vmatmul.bf16.gmra.mxu0 %v883
    %v897 = vpop.f32.mrf.mxu0
    %v898 = vadd.f32 %v116, %v897
    %v899 = vpop.f32.mrf.mxu0
    %v900 = vadd.f32 %v117, %v899
    %901 = vdwg.mxu0
    %v902 = vsel %vm197, %v898, -inf
    %903 = vmax.xlane.f32.xlu0 %v902
    %v904 = vpop.xlane.xlu0 %903
    %v905 = vsel %vm197, %v900, -inf
    %906 = vmax.xlane.f32.xlu0 %v905
    %v907 = vpop.xlane.xlu0 %906
    %v908 = vsub.f32 %v898, %v904
    %v909 = vsub.f32 %v900, %v907
    %v910 = vmul.f32 %v908, 1.442695
    %v911 = vpow.pop %v910
    %v912 = vmul.f32 %v909, 1.442695
    %v913 = vpow.pop %v912
    %v914 = vsel %vm197, %v911, 0.0
    %915 = vadd.xlane.f32.xlu0 %v914
    %v916 = vpop.xlane.xlu0 %915
    %v917 = vsel %vm197, %v913, 0.0
    %918 = vadd.xlane.f32.xlu0 %v917
    %v919 = vpop.xlane.xlu0 %918
    %v920 = vrcp.pop %v916
    %v921 = vrcp.pop %v919
    %v922 = vmul.f32 %v911, %v920
    %v923 = vmul.f32 %v913, %v921
    %v924 = vpack.c.bf16 %v923, %v922
    %925 = vrot.lane.b32.xlu0 %v807, 56
    %v926 = vpop.permute.xlu0 %925
    %v929 = vsel %vm197, %v924, 0
    %931 = vmatpush.bf16.msra.mxu0 0
    %932 = vmatpush.bf16.msra.mxu0 0
    %933 = vmatpush.bf16.msra.mxu0 0
    %934 = vmatpush.bf16.msra.mxu0 0
    %935 = vmatpush.bf16.msra.mxu0 0
    %936 = vmatpush.bf16.msra.mxu0 0
    %937 = vmatpush.bf16.msra.mxu0 0
    %938 = vmatpush.bf16.msra.mxu0 %v926
    %939 = vmatmul.bf16.gmra.mxu0 %v929
    %v940 = vpop.f32.mrf.mxu0
    %v941 = vadd.f32 0.0, %v940
    %v942 = vpop.f32.mrf.mxu0
    %v943 = vadd.f32 0.0, %v942
    %944 = vdwg.mxu0
    %v945 = vpack.c.bf16 %v943, %v941
    %s946 = scalar_lea.vmem %s7, 20
    %v947 = vld [vmem:[%s946] sm:$0xf]
    %v949 = vsel %vm176, %v945, 0
    %v952 = vsel %vm95, %v947, 0
    %954 = vmatpush.bf16.msra.mxu0 0
    %955 = vmatpush.bf16.msra.mxu0 0
    %956 = vmatpush.bf16.msra.mxu0 0
    %957 = vmatpush.bf16.msra.mxu0 0
    %958 = vmatpush.bf16.msra.mxu0 0
    %959 = vmatpush.bf16.msra.mxu0 0
    %960 = vmatpush.bf16.msra.mxu0 0
    %961 = vmatpush.bf16.msra.mxu0 %v952
    %962 = vmatmul.bf16.gmra.mxu0 %v949
    %v963 = vpop.f32.mrf.mxu0
    %v964 = vadd.f32 0.0, %v963
    %v965 = vpop.f32.mrf.mxu0
    %v966 = vadd.f32 0.0, %v965
    %967 = vdwg.mxu0
    %v969 = vsel %vm176, %v874, 0
    %v972 = vsel %vm95, %v876, 0
    %974 = vmatpush.bf16.msra.mxu0 0
    %975 = vmatpush.bf16.msra.mxu0 0
    %976 = vmatpush.bf16.msra.mxu0 0
    %977 = vmatpush.bf16.msra.mxu0 0
    %978 = vmatpush.bf16.msra.mxu0 0
    %979 = vmatpush.bf16.msra.mxu0 0
    %980 = vmatpush.bf16.msra.mxu0 0
    %981 = vmatpush.bf16.msra.mxu0 %v972
    %982 = vmatmul.bf16.gmra.mxu0 %v969
    %v983 = vpop.f32.mrf.mxu0
    %v984 = vadd.f32 %v964, %v983
    %v985 = vpop.f32.mrf.mxu0
    %v986 = vadd.f32 %v966, %v985
    %987 = vdwg.mxu0
    %988 = vrot.lane.b32.xlu0 %v806, 112
    %v989 = vpop.permute.xlu0 %988
    %990 = vrot.lane.b32.xlu0 %v807, 80
    %v991 = vpop.permute.xlu0 %990
    %v993 = vsel %vm176, %v989, 0
    %v996 = vsel %vm176, %v991, 0
    %998 = vmatpush.bf16.xpose.msra.mxu0 0
    %999 = vmatpush.bf16.xpose.msra.mxu0 0
    %1000 = vmatpush.bf16.xpose.msra.mxu0 0
    %1001 = vmatpush.bf16.xpose.msra.mxu0 0
    %1002 = vmatpush.bf16.xpose.msra.mxu0 0
    %1003 = vmatpush.bf16.xpose.msra.mxu0 0
    %1004 = vmatpush.bf16.xpose.msra.mxu0 0
    %1005 = vmatpush.bf16.xpose.msra.mxu0 %v996
    %1006 = vmatmul.bf16.gmra.mxu0 %v993
    %v1007 = vpop.f32.mrf.mxu0
    %v1008 = vadd.f32 %v116, %v1007
    %v1009 = vpop.f32.mrf.mxu0
    %v1010 = vadd.f32 %v117, %v1009
    %1011 = vdwg.mxu0
    %v1012 = vsel %vm197, %v1008, -inf
    %1013 = vmax.xlane.f32.xlu0 %v1012
    %v1014 = vpop.xlane.xlu0 %1013
    %v1015 = vsel %vm197, %v1010, -inf
    %1016 = vmax.xlane.f32.xlu0 %v1015
    %v1017 = vpop.xlane.xlu0 %1016
    %v1018 = vsub.f32 %v1008, %v1014
    %v1019 = vsub.f32 %v1010, %v1017
    %v1020 = vmul.f32 %v1018, 1.442695
    %v1021 = vpow.pop %v1020
    %v1022 = vmul.f32 %v1019, 1.442695
    %v1023 = vpow.pop %v1022
    %v1024 = vsel %vm197, %v1021, 0.0
    %1025 = vadd.xlane.f32.xlu0 %v1024
    %v1026 = vpop.xlane.xlu0 %1025
    %v1027 = vsel %vm197, %v1023, 0.0
    %1028 = vadd.xlane.f32.xlu0 %v1027
    %v1029 = vpop.xlane.xlu0 %1028
    %v1030 = vrcp.pop %v1026
    %v1031 = vrcp.pop %v1029
    %v1032 = vmul.f32 %v1021, %v1030
    %v1033 = vmul.f32 %v1023, %v1031
    %v1034 = vpack.c.bf16 %v1033, %v1032
    %1035 = vrot.lane.b32.xlu0 %v807, 48
    %v1036 = vpop.permute.xlu0 %1035
    %v1039 = vsel %vm197, %v1034, 0
    %1041 = vmatpush.bf16.msra.mxu0 0
    %1042 = vmatpush.bf16.msra.mxu0 0
    %1043 = vmatpush.bf16.msra.mxu0 0
    %1044 = vmatpush.bf16.msra.mxu0 0
    %1045 = vmatpush.bf16.msra.mxu0 0
    %1046 = vmatpush.bf16.msra.mxu0 0
    %1047 = vmatpush.bf16.msra.mxu0 0
    %1048 = vmatpush.bf16.msra.mxu0 %v1036
    %1049 = vmatmul.bf16.gmra.mxu0 %v1039
    %v1050 = vpop.f32.mrf.mxu0
    %v1051 = vadd.f32 0.0, %v1050
    %v1052 = vpop.f32.mrf.mxu0
    %v1053 = vadd.f32 0.0, %v1052
    %1054 = vdwg.mxu0
    %v1055 = vpack.c.bf16 %v1053, %v1051
    %s1056 = scalar_lea.vmem %s7, 24
    %v1057 = vld [vmem:[%s1056] sm:$0xf]
    %v1059 = vsel %vm176, %v1055, 0
    %v1062 = vsel %vm95, %v1057, 0
    %1064 = vmatpush.bf16.msra.mxu0 0
    %1065 = vmatpush.bf16.msra.mxu0 0
    %1066 = vmatpush.bf16.msra.mxu0 0
    %1067 = vmatpush.bf16.msra.mxu0 0
    %1068 = vmatpush.bf16.msra.mxu0 0
    %1069 = vmatpush.bf16.msra.mxu0 0
    %1070 = vmatpush.bf16.msra.mxu0 0
    %1071 = vmatpush.bf16.msra.mxu0 %v1062
    %1072 = vmatmul.bf16.gmra.mxu0 %v1059
    %v1073 = vpop.f32.mrf.mxu0
    %v1074 = vadd.f32 0.0, %v1073
    %v1075 = vpop.f32.mrf.mxu0
    %v1076 = vadd.f32 0.0, %v1075
    %1077 = vdwg.mxu0
    %v1078 = vadd.f32 %v984, %v1074
    %v1079 = vadd.f32 %v986, %v1076
    %1080 = vrot.lane.b32.xlu0 %v806, 104
    %v1081 = vpop.permute.xlu0 %1080
    %1082 = vrot.lane.b32.xlu0 %v807, 72
    %v1083 = vpop.permute.xlu0 %1082
    %v1085 = vsel %vm176, %v1081, 0
    %v1088 = vsel %vm176, %v1083, 0
    %1090 = vmatpush.bf16.xpose.msra.mxu0 0
    %1091 = vmatpush.bf16.xpose.msra.mxu0 0
    %1092 = vmatpush.bf16.xpose.msra.mxu0 0
    %1093 = vmatpush.bf16.xpose.msra.mxu0 0
    %1094 = vmatpush.bf16.xpose.msra.mxu0 0
    %1095 = vmatpush.bf16.xpose.msra.mxu0 0
    %1096 = vmatpush.bf16.xpose.msra.mxu0 0
    %1097 = vmatpush.bf16.xpose.msra.mxu0 %v1088
    %1098 = vmatmul.bf16.gmra.mxu0 %v1085
    %v1099 = vpop.f32.mrf.mxu0
    %v1100 = vadd.f32 %v116, %v1099
    %v1101 = vpop.f32.mrf.mxu0
    %v1102 = vadd.f32 %v117, %v1101
    %1103 = vdwg.mxu0
    %v1104 = vsel %vm197, %v1100, -inf
    %1105 = vmax.xlane.f32.xlu0 %v1104
    %v1106 = vpop.xlane.xlu0 %1105
    %v1107 = vsel %vm197, %v1102, -inf
    %1108 = vmax.xlane.f32.xlu0 %v1107
    %v1109 = vpop.xlane.xlu0 %1108
    %v1110 = vsub.f32 %v1100, %v1106
    %v1111 = vsub.f32 %v1102, %v1109
    %v1112 = vmul.f32 %v1110, 1.442695
    %v1113 = vpow.pop %v1112
    %v1114 = vmul.f32 %v1111, 1.442695
    %v1115 = vpow.pop %v1114
    %v1116 = vsel %vm197, %v1113, 0.0
    %1117 = vadd.xlane.f32.xlu0 %v1116
    %v1118 = vpop.xlane.xlu0 %1117
    %v1119 = vsel %vm197, %v1115, 0.0
    %1120 = vadd.xlane.f32.xlu0 %v1119
    %v1121 = vpop.xlane.xlu0 %1120
    %v1122 = vrcp.pop %v1118
    %v1123 = vrcp.pop %v1121
    %v1124 = vmul.f32 %v1113, %v1122
    %v1125 = vmul.f32 %v1115, %v1123
    %v1126 = vpack.c.bf16 %v1125, %v1124
    %1127 = vrot.lane.b32.xlu0 %v807, 40
    %v1128 = vpop.permute.xlu0 %1127
    %v1131 = vsel %vm197, %v1126, 0
    %1133 = vmatpush.bf16.msra.mxu0 0
    %1134 = vmatpush.bf16.msra.mxu0 0
    %1135 = vmatpush.bf16.msra.mxu0 0
    %1136 = vmatpush.bf16.msra.mxu0 0
    %1137 = vmatpush.bf16.msra.mxu0 0
    %1138 = vmatpush.bf16.msra.mxu0 0
    %1139 = vmatpush.bf16.msra.mxu0 0
    %1140 = vmatpush.bf16.msra.mxu0 %v1128
    %1141 = vmatmul.bf16.gmra.mxu0 %v1131
    %v1142 = vpop.f32.mrf.mxu0
    %v1143 = vadd.f32 0.0, %v1142
    %v1144 = vpop.f32.mrf.mxu0
    %v1145 = vadd.f32 0.0, %v1144
    %1146 = vdwg.mxu0
    %v1147 = vpack.c.bf16 %v1145, %v1143
    %s1148 = scalar_lea.vmem %s7, 28
    %v1149 = vld [vmem:[%s1148] sm:$0xf]
    %v1151 = vsel %vm176, %v1147, 0
    %v1154 = vsel %vm95, %v1149, 0
    %1156 = vmatpush.bf16.msra.mxu0 0
    %1157 = vmatpush.bf16.msra.mxu0 0
    %1158 = vmatpush.bf16.msra.mxu0 0
    %1159 = vmatpush.bf16.msra.mxu0 0
    %1160 = vmatpush.bf16.msra.mxu0 0
    %1161 = vmatpush.bf16.msra.mxu0 0
    %1162 = vmatpush.bf16.msra.mxu0 0
    %1163 = vmatpush.bf16.msra.mxu0 %v1154
    %1164 = vmatmul.bf16.gmra.mxu0 %v1151
    %v1165 = vpop.f32.mrf.mxu0
    %v1166 = vadd.f32 0.0, %v1165
    %v1167 = vpop.f32.mrf.mxu0
    %v1168 = vadd.f32 0.0, %v1167
    %1169 = vdwg.mxu0
    %v1170 = vadd.f32 %v1078, %v1166
    %v1171 = vadd.f32 %v1079, %v1168
    %s1172 = scalar_lea.vmem %s8, 1
    %v1173 = vld [vmem:[%s1172] sm:$0x1]
    %v1175 = vperm.slane %v1173, 0
    %v1177 = vadd.f32 %v1170, %v1175
    %v1178 = vadd.f32 %v1171, %v1175
    %v1179 = vadd.f32 %v748, %v1177
    %v1180 = vadd.f32 %v749, %v1178
    %s1181 = scalar_lea.vmem %s9, 1
    %v1182 = vld [vmem:[%s1181] sm:$0x1]
    %s1183 = scalar_lea.vmem %s10, 1
    %v1184 = vld [vmem:[%s1183] sm:$0x1]
    %v1185 = vsel %vm151, %v1179, 0.0
    %1186 = vadd.xlane.f32.xlu0 %v1185
    %v1187 = vpop.xlane.xlu0 %1186
    %v1188 = vsel %vm151, %v1180, 0.0
    %1189 = vadd.xlane.f32.xlu0 %v1188
    %v1190 = vpop.xlane.xlu0 %1189
    %v1191 = vmul.f32 %v1187, %v560
    %v1192 = vmul.f32 %v1190, %v560
    %v1193 = vsub.f32 %v1179, %v1191
    %v1194 = vsub.f32 %v1180, %v1192
    %v1195 = vmul.f32 %v1193, %v1193
    %v1196 = vmul.f32 %v1194, %v1194
    %v1197 = vsel %vm151, %v1195, 0.0
    %1198 = vadd.xlane.f32.xlu0 %v1197
    %v1199 = vpop.xlane.xlu0 %1198
    %v1200 = vsel %vm151, %v1196, 0.0
    %1201 = vadd.xlane.f32.xlu0 %v1200
    %v1202 = vpop.xlane.xlu0 %1201
    %v1203 = vmul.f32 %v1199, %v560
    %v1204 = vmul.f32 %v1202, %v560
    %v1205 = vadd.f32 %v1203, 1e-05
    %v1206 = vadd.f32 %v1204, 1e-05
    %v1207 = vrsqrt.pop %v1205
    %v1208 = vmul.f32 %v1207, %v1205
    %v1209 = vmul.f32 %v1208, %v1207
    %v1210 = vmul.f32 0.5, %v1209
    %v1211 = vsub.f32 1.5, %v1210
    %v1212 = vmul.f32 %v1207, %v1211
    %vm1213 = vweird.f32 %v1205
    %vm1214 = vweird.f32 %v1207
    %vm1215 = vmor %vm1213, %vm1214
    %v1216 = vsel %vm1215, %v1207, %v1212
    %v1217 = vrsqrt.pop %v1206
    %v1218 = vmul.f32 %v1217, %v1206
    %v1219 = vmul.f32 %v1218, %v1217
    %v1220 = vmul.f32 0.5, %v1219
    %v1221 = vsub.f32 1.5, %v1220
    %v1222 = vmul.f32 %v1217, %v1221
    %vm1223 = vweird.f32 %v1206
    %vm1224 = vweird.f32 %v1217
    %vm1225 = vmor %vm1223, %vm1224
    %v1226 = vsel %vm1225, %v1217, %v1222
    %v1227 = vmul.f32 %v1193, %v1216
    %v1228 = vmul.f32 %v1194, %v1226
    %v1230 = vperm.slane %v1182, 0
    %v1232 = vmul.f32 %v1227, %v1230
    %v1233 = vmul.f32 %v1228, %v1230
    %v1235 = vperm.slane %v1184, 0
    %v1237 = vadd.f32 %v1232, %v1235
    %v1238 = vadd.f32 %v1233, %v1235
    %v1239 = vpack.c.bf16 %v1238, %v1237
    %s1240 = scalar_lea.vmem %s14, 1
    %v1241 = vld [vmem:[%s1240] sm:$0x1]
    %v1243 = vperm.slane %v1241, 0
    %v1249 = vunpack.c.l.b16 %v756
    %v1250 = vunpack.c.l.b16 %v757
    %v1251 = vunpack.c.l.b16 %v758
    %v1252 = vunpack.c.l.b16 %v759
    %v1253 = vpack.c.b16 %v1250, %v1249
    %v1254 = vpack.c.b16 %v1252, %v1251
    %v1258 = vsel %vm151, %v1239, 0
    %1260 = vmatpush.bf16.msra.mxu0 0
    %1261 = vmatpush.bf16.msra.mxu0 0
    %1262 = vmatpush.bf16.msra.mxu0 0
    %1263 = vmatpush.bf16.msra.mxu0 0
    %1264 = vmatpush.bf16.msra.mxu0 0
    %1265 = vmatpush.bf16.msra.mxu0 0
    %1266 = vmatpush.bf16.msra.mxu0 %v1254
    %1267 = vmatpush.bf16.msra.mxu0 %v1253
    %1268 = vmatmul.bf16.gmra.mxu0 %v1258
    %v1269 = vpop.f32.mrf.mxu0
    %v1270 = vadd.f32 %v1243, %v1269
    %v1271 = vpop.f32.mrf.mxu0
    %v1272 = vadd.f32 %v1243, %v1271
    %1273 = vdwg.mxu0
    %v1274 = vmax.f32 %v1270, 0.0
    %v1275 = vmax.f32 %v1272, 0.0
    %v1276 = vpack.c.bf16 %v1275, %v1274
    %s1277 = scalar_lea.vmem %s16, 1
    %v1278 = vld [vmem:[%s1277] sm:$0x1]
    %v1280 = vperm.slane %v1278, 0
    %v1290 = vunpack.c.l.b16 %v761
    %v1291 = vunpack.c.l.b16 %v762
    %v1292 = vunpack.c.l.b16 %v763
    %v1293 = vunpack.c.l.b16 %v764
    %v1294 = vunpack.c.l.b16 %v765
    %v1295 = vunpack.c.l.b16 %v766
    %v1296 = vunpack.c.l.b16 %v767
    %v1297 = vunpack.c.l.b16 %v768
    %v1298 = vpack.c.b16 %v1291, %v1290
    %v1299 = vpack.c.b16 %v1293, %v1292
    %v1300 = vpack.c.b16 %v1295, %v1294
    %v1301 = vpack.c.b16 %v1297, %v1296
    %v1307 = vsel %vm674, %v1276, 0
    %1309 = vmatpush.bf16.msra.mxu0 0
    %1310 = vmatpush.bf16.msra.mxu0 0
    %1311 = vmatpush.bf16.msra.mxu0 0
    %1312 = vmatpush.bf16.msra.mxu0 0
    %1313 = vmatpush.bf16.msra.mxu0 %v1301
    %1314 = vmatpush.bf16.msra.mxu0 %v1300
    %1315 = vmatpush.bf16.msra.mxu0 %v1299
    %1316 = vmatpush.bf16.msra.mxu0 %v1298
    %1317 = vmatmul.bf16.gmra.mxu0 %v1307
    %v1318 = vpop.f32.mrf.mxu0
    %v1319 = vadd.f32 %v1280, %v1318
    %v1320 = vpop.f32.mrf.mxu0
    %v1321 = vadd.f32 %v1280, %v1320
    %1322 = vdwg.mxu0
    %v1323 = vadd.f32 %v1237, %v1319
    %v1324 = vadd.f32 %v1238, %v1321
    %s1325 = scalar_lea.vmem %s11, 1
    %v1326 = vld [vmem:[%s1325] sm:$0x1]
    %s1327 = scalar_lea.vmem %s12, 1
    %v1328 = vld [vmem:[%s1327] sm:$0x1]
    %v1329 = vsel %vm151, %v1323, 0.0
    %1330 = vadd.xlane.f32.xlu0 %v1329
    %v1331 = vpop.xlane.xlu0 %1330
    %v1332 = vsel %vm151, %v1324, 0.0
    %1333 = vadd.xlane.f32.xlu0 %v1332
    %v1334 = vpop.xlane.xlu0 %1333
    %v1335 = vmul.f32 %v1331, %v560
    %v1336 = vmul.f32 %v1334, %v560
    %v1337 = vsub.f32 %v1323, %v1335
    %v1338 = vsub.f32 %v1324, %v1336
    %v1339 = vmul.f32 %v1337, %v1337
    %v1340 = vmul.f32 %v1338, %v1338
    %v1341 = vsel %vm151, %v1339, 0.0
    %1342 = vadd.xlane.f32.xlu0 %v1341
    %v1343 = vpop.xlane.xlu0 %1342
    %v1344 = vsel %vm151, %v1340, 0.0
    %1345 = vadd.xlane.f32.xlu0 %v1344
    %v1346 = vpop.xlane.xlu0 %1345
    %v1347 = vmul.f32 %v1343, %v560
    %v1348 = vmul.f32 %v1346, %v560
    %v1349 = vadd.f32 %v1347, 1e-05
    %v1350 = vadd.f32 %v1348, 1e-05
    %v1351 = vrsqrt.pop %v1349
    %v1352 = vmul.f32 %v1351, %v1349
    %v1353 = vmul.f32 %v1352, %v1351
    %v1354 = vmul.f32 0.5, %v1353
    %v1355 = vsub.f32 1.5, %v1354
    %v1356 = vmul.f32 %v1351, %v1355
    %vm1357 = vweird.f32 %v1349
    %vm1358 = vweird.f32 %v1351
    %vm1359 = vmor %vm1357, %vm1358
    %v1360 = vsel %vm1359, %v1351, %v1356
    %v1361 = vrsqrt.pop %v1350
    %v1362 = vmul.f32 %v1361, %v1350
    %v1363 = vmul.f32 %v1362, %v1361
    %v1364 = vmul.f32 0.5, %v1363
    %v1365 = vsub.f32 1.5, %v1364
    %v1366 = vmul.f32 %v1361, %v1365
    %vm1367 = vweird.f32 %v1350
    %vm1368 = vweird.f32 %v1361
    %vm1369 = vmor %vm1367, %vm1368
    %v1370 = vsel %vm1369, %v1361, %v1366
    %v1371 = vmul.f32 %v1337, %v1360
    %v1372 = vmul.f32 %v1338, %v1370
    %v1374 = vperm.slane %v1326, 0
    %v1376 = vmul.f32 %v1371, %v1374
    %v1377 = vmul.f32 %v1372, %v1374
    %v1379 = vperm.slane %v1328, 0
    %v1381 = vadd.f32 %v1376, %v1379
    %v1382 = vadd.f32 %v1377, %v1379
    %v1383 = vld [vmem:[%s17] sm:$0x1]
    %v1384 = vld [vmem:[%s18] sm:$0x1]
    %v1385 = vsel %vm151, %v1381, 0.0
    %1386 = vadd.xlane.f32.xlu0 %v1385
    %v1387 = vpop.xlane.xlu0 %1386
    %v1388 = vsel %vm151, %v1382, 0.0
    %1389 = vadd.xlane.f32.xlu0 %v1388
    %v1390 = vpop.xlane.xlu0 %1389
    %v1391 = vmul.f32 %v1387, %v560
    %v1392 = vmul.f32 %v1390, %v560
    %v1393 = vsub.f32 %v1381, %v1391
    %v1394 = vsub.f32 %v1382, %v1392
    %v1395 = vmul.f32 %v1393, %v1393
    %v1396 = vmul.f32 %v1394, %v1394
    %v1397 = vsel %vm151, %v1395, 0.0
    %1398 = vadd.xlane.f32.xlu0 %v1397
    %v1399 = vpop.xlane.xlu0 %1398
    %v1400 = vsel %vm151, %v1396, 0.0
    %1401 = vadd.xlane.f32.xlu0 %v1400
    %v1402 = vpop.xlane.xlu0 %1401
    %v1403 = vmul.f32 %v1399, %v560
    %v1404 = vmul.f32 %v1402, %v560
    %v1405 = vadd.f32 %v1403, 1e-05
    %v1406 = vadd.f32 %v1404, 1e-05
    %v1407 = vrsqrt.pop %v1405
    %v1408 = vmul.f32 %v1407, %v1405
    %v1409 = vmul.f32 %v1408, %v1407
    %v1410 = vmul.f32 0.5, %v1409
    %v1411 = vsub.f32 1.5, %v1410
    %v1412 = vmul.f32 %v1407, %v1411
    %vm1413 = vweird.f32 %v1405
    %vm1414 = vweird.f32 %v1407
    %vm1415 = vmor %vm1413, %vm1414
    %v1416 = vsel %vm1415, %v1407, %v1412
    %v1417 = vrsqrt.pop %v1406
    %v1418 = vmul.f32 %v1417, %v1406
    %v1419 = vmul.f32 %v1418, %v1417
    %v1420 = vmul.f32 0.5, %v1419
    %v1421 = vsub.f32 1.5, %v1420
    %v1422 = vmul.f32 %v1417, %v1421
    %vm1423 = vweird.f32 %v1406
    %vm1424 = vweird.f32 %v1417
    %vm1425 = vmor %vm1423, %vm1424
    %v1426 = vsel %vm1425, %v1417, %v1422
    %v1427 = vmul.f32 %v1393, %v1416
    %v1428 = vmul.f32 %v1394, %v1426
    %v1430 = vperm.slane %v1383, 0
    %v1432 = vmul.f32 %v1427, %v1430
    %v1433 = vmul.f32 %v1428, %v1430
    %v1435 = vperm.slane %v1384, 0
    %v1437 = vadd.f32 %v1432, %v1435
    %v1438 = vadd.f32 %v1433, %v1435
    %v1439 = vsel %vm151, %v1437, 0.0
    %v1440 = vrot.slane %v1439, 4
    %v1441 = vadd.f32 %v1439, %v1440
    %v1442 = vrot.slane %v1441, 2
    %v1443 = vadd.f32 %v1441, %v1442
    %v1444 = vrot.slane %v1443, 1
    %v1445 = vadd.f32 %v1443, %v1444
    %v1446 = vrcp.pop 8.0
    %v1447 = vmul.f32 8.0, %v1446
    %v1448 = vsub.f32 1.0, %v1447
    %v1449 = vmul.f32 %v1446, %v1448
    %v1450 = vadd.f32 %v1446, %v1449
    %vm1451 = vweird.f32 %v1446
    %v1452 = vsel %vm1451, %v1446, %v1450
    %v1453 = vmul.f32 %v1445, %v1452
    %v1454 = vsel %vm151, %v1438, 0.0
    %v1455 = vrot.slane %v1454, 4
    %v1456 = vadd.f32 %v1454, %v1455
    %v1457 = vrot.slane %v1456, 2
    %v1458 = vadd.f32 %v1456, %v1457
    %v1459 = vrot.slane %v1458, 1
    %v1460 = vadd.f32 %v1458, %v1459
    %v1461 = vmul.f32 %v1460, %v1452
    %vm1462 = vcmask 1040384
    %v1463 = vsel %vm1462, %v1453, %v1461
    %vm1464 = vcmask 254976
    %1465 = vst.msk [vmem:[#allocation2] sm:$0x3] %vm1464, %v1463
    // Predicated region
    $region78: #{eeg_transformer_encoder.1} parent=1 // pred_check
      _
    $region79: #{eeg_transformer_encoder.1} parent=1 // pred_check_branch
      %1467 = sbr.rel (0) target = $region81
    $region80: #{eeg_transformer_encoder.1} parent=1 // pred_region
      %1469 = vsyncadd [#allocation3], 0
      %s1471 = sshll.u32 [#allocation2], 4
      %s1472 = int_to_ptr.vmem [resolvable:$true] %s1471
      %s1473 = sshll.u32 %s19, 4
      %s1474 = int_to_ptr.hbm [resolvable:$true] %s1473
      %1476 = dma.vmem_to_hbm [thread:$0]  %s1472, 32, %s1474, [#allocation3]
    $region81: #{eeg_transformer_encoder.1} parent=1 // pred_fallthru
      _
    // Predicated region
    $region82: #{eeg_transformer_encoder.1} parent=1 // pred_check
      _
    $region83: #{eeg_transformer_encoder.1} parent=1 // pred_check_branch
      %1478 = sbr.rel (0) target = $region85
    $region84: #{eeg_transformer_encoder.1} parent=1 // pred_region
      %1480 = dma.done [#allocation3], 32
    $region85: #{eeg_transformer_encoder.1} parent=1 // pred_fallthru
      _
    %1481 = vsyncpa [#allocation3], 1

</llo_original>
